<compile_context>
chip_gen: v7x
topology: tpu7x:2x2x1
jax: 0.10.0
libtpu: 0.0.40
codegen_flags: <defaults>
</compile_context>

<pallas_src>
import functools

import jax
import jax.numpy as jnp
from jax.experimental import pallas as pl
from jax.experimental.pallas import tpu as pltpu

LANE = 128      # lane width (last dim)
SUBLANE = 8     # f32/bf16-friendly sublane multiple for the batch tile


def _round_up(x, m):
    return (x + m - 1) // m * m


# ------------------------------ Fused kernel --------------------------------

def _fused_mlp_kernel(x_ref,
                      w0_ref, b0_ref, w1_ref, b1_ref, w2_ref, b2_ref,
                      w3_ref, b3_ref, w4_ref, b4_ref,
                      o_ref, *, num_classes, tm, valid_rows):
    """Whole MLP for one batch tile: 4x (Linear+ReLU) + Linear + log_softmax."""

    def linear_relu(h_bf16, w_ref, b_ref):
        y = jnp.dot(h_bf16, w_ref[...], preferred_element_type=jnp.float32)
        y = y + b_ref[...]                        # (1, N) bias broadcasts
        return jnp.maximum(y, 0.0).astype(jnp.bfloat16)

    h = x_ref[...]                                # already bf16 in HBM/VMEM
    if valid_rows is not None:
        # Ragged last tile: zero the rows that lie past the real batch so no
        # garbage (possibly non-finite) values flow through the tile.
        row = (pl.program_id(0) * tm
               + jax.lax.broadcasted_iota(jnp.int32, (tm, 1), 0))
        h = jnp.where(row < valid_rows, h, jnp.bfloat16(0))

    h = linear_relu(h, w0_ref, b0_ref)
    h = linear_relu(h, w1_ref, b1_ref)
    h = linear_relu(h, w2_ref, b2_ref)
    h = linear_relu(h, w3_ref, b3_ref)

    # Classifier on a lane-padded (TM, 128) slab; mask the padded columns.
    y = jnp.dot(h, w4_ref[...], preferred_element_type=jnp.float32)
    y = y + b4_ref[...]
    col = jax.lax.broadcasted_iota(jnp.int32, y.shape, dimension=1)
    y = jnp.where(col < num_classes, y, jnp.float32(-1e30))

    m = jnp.max(y, axis=-1, keepdims=True)
    z = y - m
    lse = jnp.log(jnp.sum(jnp.exp(z), axis=-1, keepdims=True))
    o_ref[...] = (z - lse).astype(o_ref.dtype)    # lane-dense (TM, 128) store


# ------------------------------ Parameter init -------------------------------

def _init_linear(key, fan_in, fan_out):
    """PyTorch nn.Linear default init: U(-1/sqrt(fan_in), 1/sqrt(fan_in))."""
    kw, kb = jax.random.split(key)
    bound = 1.0 / jnp.sqrt(jnp.float32(fan_in))
    # stored as [in, out] so the kernel does x @ W directly
    w = jax.random.uniform(kw, (fan_in, fan_out), jnp.float32, -bound, bound)
    b = jax.random.uniform(kb, (1, fan_out), jnp.float32, -bound, bound)
    return w, b


def init_mlp_params(seed, n_feature, n_hidden=1024, num_classes=10):
    key = jax.random.PRNGKey(seed)
    keys = jax.random.split(key, 5)
    dims = [
        (n_feature, n_hidden),
        (n_hidden, n_hidden),
        (n_hidden, n_hidden),
        (n_hidden, n_hidden // 2),
        (n_hidden // 2, num_classes),
    ]
    return [_init_linear(k, fi, fo) for k, (fi, fo) in zip(keys, dims)]


def prepare_mlp_params(params, n_feature, num_classes=10):
    """One-time kernel-ready packing.  Do NOT call per forward.

    - bf16 weights ([in, out]) for the MXU; biases stay f32.
    - w0 rows zero-padded so the first (hottest) contraction dim is a
      multiple of 128 lanes.
    - classifier zero-padded to a lane-dense 128-wide slab.
    """
    (w0, b0), (w1, b1), (w2, b2), (w3, b3), (w4, b4) = params

    k_pad = _round_up(n_feature, LANE)
    w0p = w0.astype(jnp.bfloat16)
    if k_pad != n_feature:
        w0p = jnp.pad(w0p, ((0, k_pad - n_feature), (0, 0)))  # zero rows: exact

    ncls_pad = _round_up(num_classes, LANE)
    w4p = jnp.zeros((w4.shape[0], ncls_pad), jnp.bfloat16)
    w4p = w4p.at[:, :num_classes].set(w4.astype(jnp.bfloat16))
    b4p = jnp.zeros((1, ncls_pad), jnp.float32).at[:, :num_classes].set(b4)

    weights = (w0p, b0,
               w1.astype(jnp.bfloat16), b1,
               w2.astype(jnp.bfloat16), b2,
               w3.astype(jnp.bfloat16), b3,
               w4p, b4p)
    # Materialize now so no per-forward cast/pad ops remain.
    weights = tuple(jax.block_until_ready(w) for w in weights)
    return {"weights": weights, "k_pad": k_pad, "ncls_pad": ncls_pad,
            "num_classes": num_classes}


# -------------------------------- Tiling heuristic ----------------------------

def _choose_tm(batch):
    if batch <= SUBLANE:
        return _round_up(batch, SUBLANE)
    if batch < 2 * LANE:
        # Small batches: two roughly-equal sublane-aligned tiles so v7x's
        # 2 TensorCores both get work.
        return _round_up(pl.cdiv(batch, 2), SUBLANE)
    # Large batches: biggest MXU-friendly tile (multiple of 128, <=512) that
    # still yields >=2 grid steps (v7x megacore) while amortizing the
    # ~0.35us/step pipeline overhead on single-TC v5e/v6e.
    for tm in (512, 256, 128):
        if pl.cdiv(batch, tm) >= 2:
            return tm
    return 128


# -------------------------------- Forward pass --------------------------------

def mlp_forward(prepared, x, n_feature):
    weights = prepared["weights"]
    k_pad = prepared["k_pad"]
    ncls_pad = prepared["ncls_pad"]
    num_classes = prepared["num_classes"]

    # x.view(-1, n_feature); stream activations as bf16 (MXU input dtype).
    x = x.reshape(-1, n_feature).astype(jnp.bfloat16)
    B = x.shape[0]
    if k_pad != n_feature:
        # TODO(synk): fold this column pad into the producer of x to avoid
        # one extra HBM copy when n_feature is not a multiple of 128.
        x = jnp.pad(x, ((0, 0), (0, k_pad - n_feature)))

    TM = _choose_tm(B)
    grid = (pl.cdiv(B, TM),)
    ragged = (B % TM) != 0          # last tile handled by Pallas block padding

    def const_spec(a):
        # Whole array, same block index every grid step -> fetched once and
        # VMEM-resident; single-buffered so weight VMEM is not doubled.
        return pl.BlockSpec(a.shape, lambda i: (0,) * a.ndim,
                            pipeline_mode=pl.Buffered(1))

    in_specs = [pl.BlockSpec((TM, k_pad), lambda i: (i, 0))]
    in_specs += [const_spec(a) for a in weights]

    # Advisory cost estimate for XLA scheduling.
    mm_dims = [(weights[0].shape[0], weights[0].shape[1]),
               (weights[2].shape[0], weights[2].shape[1]),
               (weights[4].shape[0], weights[4].shape[1]),
               (weights[6].shape[0], weights[6].shape[1]),
               (weights[8].shape[0], weights[8].shape[1])]
    flops = int(2 * B * sum(fi * fo for fi, fo in mm_dims))
    bytes_accessed = int(x.size * x.dtype.itemsize
                         + sum(a.size * a.dtype.itemsize for a in weights)
                         + B * ncls_pad * 4)

    kernel = functools.partial(_fused_mlp_kernel,
                               num_classes=num_classes, tm=TM,
                               valid_rows=B if ragged else None)

    out = pl.pallas_call(
        kernel,
        out_shape=jax.ShapeDtypeStruct((B, ncls_pad), jnp.float32),
        grid=grid,
        in_specs=in_specs,
        out_specs=pl.BlockSpec((TM, ncls_pad), lambda i: (i, 0)),
        compiler_params=pltpu.CompilerParams(
            dimension_semantics=("parallel",),      # v7x: shard batch tiles
            vmem_limit_bytes=64 << 20),             # fits v5e/v6e/v7x VMEM
        cost_estimate=pl.CostEstimate(
            flops=flops,
            transcendentals=int(B * (ncls_pad + 1)),
            bytes_accessed=bytes_accessed),
    )(x, *weights)

    # Drop the lane padding of the class dimension.
    return out[:, :num_classes]


# ------------------------------------ Main ------------------------------------

if __name__ == "__main__":
    # Small shapes: input [2, 4, 16, 16] -> n_feature = 4*16*16 = 1024
    B, C, H, W = 2, 4, 16, 16
    n_feature = C * H * W
    n_hidden = 256          # small test size (module default is 1024)
    num_classes = 10

    params = init_mlp_params(seed=0, n_feature=n_feature,
                             n_hidden=n_hidden, num_classes=num_classes)
    prepared = prepare_mlp_params(params, n_feature, num_classes=num_classes)

    key = jax.random.PRNGKey(0)
    x = jax.random.normal(key, (B, C, H, W), dtype=jnp.float32)

    out = mlp_forward(prepared, x, n_feature)
    out = jax.block_until_ready(out)

    # sanity: shape + log_softmax rows should sum (in prob space) to ~1
    assert out.shape == (B, num_classes), out.shape
    row_sums = jnp.exp(out).sum(axis=-1)
    assert jnp.allclose(row_sums, 1.0, atol=1e-3), row_sums
    assert bool(jnp.all(jnp.isfinite(out))), "non-finite log-probs"

    # Cross-check against a pure-JAX reference using the same bf16/f32 math.
    def ref_forward(params, xin):
        h = xin.reshape(-1, n_feature).astype(jnp.bfloat16)
        logits = None
        for i, (w, b) in enumerate(params):
            y = jnp.dot(h, w.astype(jnp.bfloat16),
                        preferred_element_type=jnp.float32) + b
            if i < 4:
                h = jnp.maximum(y, 0.0).astype(jnp.bfloat16)
            else:
                logits = y
        return jax.nn.log_softmax(logits, axis=-1)

    ref = jax.block_until_ready(ref_forward(params, x))
    assert jnp.allclose(out, ref, atol=5e-2, rtol=5e-2), (out, ref)

    print("KERNEL_OK")
</pallas_src>

<mosaic_0001>
module attributes {stable_mosaic.version = 11 : i64} {
  func.func @_fused_mlp_kernel(%arg0: i32, %arg1: memref<8x1024xbf16, #tpu.memory_space<vmem>>, %arg2: memref<1024x256xbf16, #tpu.memory_space<vmem>>, %arg3: memref<1x256xf32, #tpu.memory_space<vmem>>, %arg4: memref<256x256xbf16, #tpu.memory_space<vmem>>, %arg5: memref<1x256xf32, #tpu.memory_space<vmem>>, %arg6: memref<256x256xbf16, #tpu.memory_space<vmem>>, %arg7: memref<1x256xf32, #tpu.memory_space<vmem>>, %arg8: memref<256x128xbf16, #tpu.memory_space<vmem>>, %arg9: memref<1x128xf32, #tpu.memory_space<vmem>>, %arg10: memref<128x128xbf16, #tpu.memory_space<vmem>>, %arg11: memref<1x128xf32, #tpu.memory_space<vmem>>, %arg12: memref<8x128xf32, #tpu.memory_space<vmem>>) attributes {dimension_semantics = [#tpu.dimension_semantics<parallel>], iteration_bounds = array<i64: 1>, scalar_prefetch = 0 : i64, scratch_operands = 0 : i64, tpu.core_type = #tpu.core_type<tc>, window_params = [{transform_indices = @transform_0, window_bounds = array<i64: 8, 1024>}, {pipeline_mode = #tpu.pipeline_mode<synchronous>, transform_indices = @transform_1, window_bounds = array<i64: 1024, 256>}, {pipeline_mode = #tpu.pipeline_mode<synchronous>, transform_indices = @transform_2, window_bounds = array<i64: 1, 256>}, {pipeline_mode = #tpu.pipeline_mode<synchronous>, transform_indices = @transform_3, window_bounds = array<i64: 256, 256>}, {pipeline_mode = #tpu.pipeline_mode<synchronous>, transform_indices = @transform_4, window_bounds = array<i64: 1, 256>}, {pipeline_mode = #tpu.pipeline_mode<synchronous>, transform_indices = @transform_5, window_bounds = array<i64: 256, 256>}, {pipeline_mode = #tpu.pipeline_mode<synchronous>, transform_indices = @transform_6, window_bounds = array<i64: 1, 256>}, {pipeline_mode = #tpu.pipeline_mode<synchronous>, transform_indices = @transform_7, window_bounds = array<i64: 256, 128>}, {pipeline_mode = #tpu.pipeline_mode<synchronous>, transform_indices = @transform_8, window_bounds = array<i64: 1, 128>}, {pipeline_mode = #tpu.pipeline_mode<synchronous>, transform_indices = @transform_9, window_bounds = array<i64: 128, 128>}, {pipeline_mode = #tpu.pipeline_mode<synchronous>, transform_indices = @transform_10, window_bounds = array<i64: 1, 128>}, {transform_indices = @transform_11, window_bounds = array<i64: 8, 128>}]} {
    %c0 = arith.constant 0 : index
    %c0_0 = arith.constant 0 : index
    %0 = vector.load %arg1[%c0, %c0_0] : memref<8x1024xbf16, #tpu.memory_space<vmem>>, vector<8x1024xbf16>
    %c8_i32 = arith.constant 8 : i32
    %1 = arith.muli %arg0, %c8_i32 : i32
    %2 = tpu.iota {dimensions = array<i32: 0>} : vector<8x1xi32>
    %3 = vector.broadcast %1 : i32 to vector<8x1xi32>
    %4 = arith.addi %3, %2 : vector<8x1xi32>
    %c2_i32 = arith.constant 2 : i32
    %5 = vector.broadcast %c2_i32 : i32 to vector<8x1xi32>
    %6 = arith.cmpi slt, %4, %5 : vector<8x1xi32>
    %cst = arith.constant 0.000000e+00 : bf16
    %7 = vector.shape_cast %6 : vector<8x1xi1> to vector<8x1xi1>
    %8 = vector.broadcast %7 : vector<8x1xi1> to vector<8x1024xi1>
    %9 = vector.broadcast %cst : bf16 to vector<8x1024xbf16>
    %10 = arith.select %8, %0, %9 : vector<8x1024xi1>, vector<8x1024xbf16>
    %c0_1 = arith.constant 0 : index
    %c0_2 = arith.constant 0 : index
    %11 = vector.load %arg2[%c0_1, %c0_2] : memref<1024x256xbf16, #tpu.memory_space<vmem>>, vector<1024x256xbf16>
    %cst_3 = arith.constant dense<0.000000e+00> : vector<8x256xf32>
    %12 = tpu.matmul %10, %11, %cst_3 {dimension_numbers = #tpu.dot_dimension_numbers<[1], [0], [0], [1], [0, 0, 1, 1], [], []>} : vector<8x1024xbf16>, vector<1024x256xbf16>, vector<8x256xf32> -> vector<8x256xf32>
    %c0_4 = arith.constant 0 : index
    %c0_5 = arith.constant 0 : index
    %13 = vector.load %arg3[%c0_4, %c0_5] : memref<1x256xf32, #tpu.memory_space<vmem>>, vector<1x256xf32>
    %14 = vector.broadcast %13 : vector<1x256xf32> to vector<8x256xf32>
    %15 = arith.addf %12, %14 : vector<8x256xf32>
    %cst_6 = arith.constant 0.000000e+00 : f32
    %16 = vector.broadcast %cst_6 : f32 to vector<8x256xf32>
    %17 = arith.maximumf %15, %16 : vector<8x256xf32>
    %18 = arith.truncf %17 : vector<8x256xf32> to vector<8x256xbf16>
    %c0_7 = arith.constant 0 : index
    %c0_8 = arith.constant 0 : index
    %19 = vector.load %arg4[%c0_7, %c0_8] : memref<256x256xbf16, #tpu.memory_space<vmem>>, vector<256x256xbf16>
    %cst_9 = arith.constant dense<0.000000e+00> : vector<8x256xf32>
    %20 = tpu.matmul %18, %19, %cst_9 {dimension_numbers = #tpu.dot_dimension_numbers<[1], [0], [0], [1], [0, 0, 1, 1], [], []>} : vector<8x256xbf16>, vector<256x256xbf16>, vector<8x256xf32> -> vector<8x256xf32>
    %c0_10 = arith.constant 0 : index
    %c0_11 = arith.constant 0 : index
    %21 = vector.load %arg5[%c0_10, %c0_11] : memref<1x256xf32, #tpu.memory_space<vmem>>, vector<1x256xf32>
    %22 = vector.broadcast %21 : vector<1x256xf32> to vector<8x256xf32>
    %23 = arith.addf %20, %22 : vector<8x256xf32>
    %cst_12 = arith.constant 0.000000e+00 : f32
    %24 = vector.broadcast %cst_12 : f32 to vector<8x256xf32>
    %25 = arith.maximumf %23, %24 : vector<8x256xf32>
    %26 = arith.truncf %25 : vector<8x256xf32> to vector<8x256xbf16>
    %c0_13 = arith.constant 0 : index
    %c0_14 = arith.constant 0 : index
    %27 = vector.load %arg6[%c0_13, %c0_14] : memref<256x256xbf16, #tpu.memory_space<vmem>>, vector<256x256xbf16>
    %cst_15 = arith.constant dense<0.000000e+00> : vector<8x256xf32>
    %28 = tpu.matmul %26, %27, %cst_15 {dimension_numbers = #tpu.dot_dimension_numbers<[1], [0], [0], [1], [0, 0, 1, 1], [], []>} : vector<8x256xbf16>, vector<256x256xbf16>, vector<8x256xf32> -> vector<8x256xf32>
    %c0_16 = arith.constant 0 : index
    %c0_17 = arith.constant 0 : index
    %29 = vector.load %arg7[%c0_16, %c0_17] : memref<1x256xf32, #tpu.memory_space<vmem>>, vector<1x256xf32>
    %30 = vector.broadcast %29 : vector<1x256xf32> to vector<8x256xf32>
    %31 = arith.addf %28, %30 : vector<8x256xf32>
    %cst_18 = arith.constant 0.000000e+00 : f32
    %32 = vector.broadcast %cst_18 : f32 to vector<8x256xf32>
    %33 = arith.maximumf %31, %32 : vector<8x256xf32>
    %34 = arith.truncf %33 : vector<8x256xf32> to vector<8x256xbf16>
    %c0_19 = arith.constant 0 : index
    %c0_20 = arith.constant 0 : index
    %35 = vector.load %arg8[%c0_19, %c0_20] : memref<256x128xbf16, #tpu.memory_space<vmem>>, vector<256x128xbf16>
    %cst_21 = arith.constant dense<0.000000e+00> : vector<8x128xf32>
    %36 = tpu.matmul %34, %35, %cst_21 {dimension_numbers = #tpu.dot_dimension_numbers<[1], [0], [0], [1], [0, 0, 1, 1], [], []>} : vector<8x256xbf16>, vector<256x128xbf16>, vector<8x128xf32> -> vector<8x128xf32>
    %c0_22 = arith.constant 0 : index
    %c0_23 = arith.constant 0 : index
    %37 = vector.load %arg9[%c0_22, %c0_23] : memref<1x128xf32, #tpu.memory_space<vmem>>, vector<1x128xf32>
    %38 = vector.broadcast %37 : vector<1x128xf32> to vector<8x128xf32>
    %39 = arith.addf %36, %38 : vector<8x128xf32>
    %cst_24 = arith.constant 0.000000e+00 : f32
    %40 = vector.broadcast %cst_24 : f32 to vector<8x128xf32>
    %41 = arith.maximumf %39, %40 : vector<8x128xf32>
    %42 = arith.truncf %41 : vector<8x128xf32> to vector<8x128xbf16>
    %c0_25 = arith.constant 0 : index
    %c0_26 = arith.constant 0 : index
    %43 = vector.load %arg10[%c0_25, %c0_26] : memref<128x128xbf16, #tpu.memory_space<vmem>>, vector<128x128xbf16>
    %cst_27 = arith.constant dense<0.000000e+00> : vector<8x128xf32>
    %44 = tpu.matmul %42, %43, %cst_27 {dimension_numbers = #tpu.dot_dimension_numbers<[1], [0], [0], [1], [0, 0, 1, 1], [], []>} : vector<8x128xbf16>, vector<128x128xbf16>, vector<8x128xf32> -> vector<8x128xf32>
    %c0_28 = arith.constant 0 : index
    %c0_29 = arith.constant 0 : index
    %45 = vector.load %arg11[%c0_28, %c0_29] : memref<1x128xf32, #tpu.memory_space<vmem>>, vector<1x128xf32>
    %46 = vector.broadcast %45 : vector<1x128xf32> to vector<8x128xf32>
    %47 = arith.addf %44, %46 : vector<8x128xf32>
    %48 = tpu.iota {dimensions = array<i32: 1>} : vector<8x128xi32>
    %c10_i32 = arith.constant 10 : i32
    %49 = vector.broadcast %c10_i32 : i32 to vector<8x128xi32>
    %50 = arith.cmpi slt, %48, %49 : vector<8x128xi32>
    %cst_30 = arith.constant -1.000000e+30 : f32
    %51 = vector.broadcast %cst_30 : f32 to vector<8x128xf32>
    %52 = arith.select %50, %47, %51 : vector<8x128xi1>, vector<8x128xf32>
    %cst_31 = arith.constant dense<0xFF800000> : vector<8xf32>
    %53 = vector.multi_reduction <maximumf>, %52, %cst_31 [1] : vector<8x128xf32> to vector<8xf32>
    %54 = vector.shape_cast %53 : vector<8xf32> to vector<8x1xf32>
    %55 = vector.broadcast %54 : vector<8x1xf32> to vector<8x128xf32>
    %56 = arith.subf %52, %55 : vector<8x128xf32>
    %57 = math.exp %56 : vector<8x128xf32>
    %cst_32 = arith.constant dense<0.000000e+00> : vector<8xf32>
    %58 = vector.multi_reduction <add>, %57, %cst_32 [1] : vector<8x128xf32> to vector<8xf32>
    %59 = vector.shape_cast %58 : vector<8xf32> to vector<8x1xf32>
    %60 = math.log %59 : vector<8x1xf32>
    %61 = vector.broadcast %60 : vector<8x1xf32> to vector<8x128xf32>
    %62 = arith.subf %56, %61 : vector<8x128xf32>
    %c0_33 = arith.constant 0 : index
    %c0_34 = arith.constant 0 : index
    %63 = vector.load %arg12[%c0_33, %c0_34] : memref<8x128xf32, #tpu.memory_space<vmem>>, vector<8x128xf32>
    tpu.vector_store %arg12[%c0_33, %c0_34], %62 {strides = array<i32>} : memref<8x128xf32, #tpu.memory_space<vmem>>, vector<8x128xf32>,
    return
  }
  func.func @transform_0(%arg0: i32) -> (i32, i32) {
    %c0_i32 = arith.constant 0 : i32
    %c0_i32_0 = arith.constant 0 : i32
    return %arg0, %c0_i32 : i32, i32
  }
  func.func @transform_1(%arg0: i32) -> (i32, i32) {
    %c0_i32 = arith.constant 0 : i32
    %c0_i32_0 = arith.constant 0 : i32
    %c0_i32_1 = arith.constant 0 : i32
    return %c0_i32, %c0_i32_0 : i32, i32
  }
  func.func @transform_2(%arg0: i32) -> (i32, i32) {
    %c0_i32 = arith.constant 0 : i32
    %c0_i32_0 = arith.constant 0 : i32
    %c0_i32_1 = arith.constant 0 : i32
    return %c0_i32, %c0_i32_0 : i32, i32
  }
  func.func @transform_3(%arg0: i32) -> (i32, i32) {
    %c0_i32 = arith.constant 0 : i32
    %c0_i32_0 = arith.constant 0 : i32
    %c0_i32_1 = arith.constant 0 : i32
    return %c0_i32, %c0_i32_0 : i32, i32
  }
  func.func @transform_4(%arg0: i32) -> (i32, i32) {
    %c0_i32 = arith.constant 0 : i32
    %c0_i32_0 = arith.constant 0 : i32
    %c0_i32_1 = arith.constant 0 : i32
    return %c0_i32, %c0_i32_0 : i32, i32
  }
  func.func @transform_5(%arg0: i32) -> (i32, i32) {
    %c0_i32 = arith.constant 0 : i32
    %c0_i32_0 = arith.constant 0 : i32
    %c0_i32_1 = arith.constant 0 : i32
    return %c0_i32, %c0_i32_0 : i32, i32
  }
  func.func @transform_6(%arg0: i32) -> (i32, i32) {
    %c0_i32 = arith.constant 0 : i32
    %c0_i32_0 = arith.constant 0 : i32
    %c0_i32_1 = arith.constant 0 : i32
    return %c0_i32, %c0_i32_0 : i32, i32
  }
  func.func @transform_7(%arg0: i32) -> (i32, i32) {
    %c0_i32 = arith.constant 0 : i32
    %c0_i32_0 = arith.constant 0 : i32
    %c0_i32_1 = arith.constant 0 : i32
    return %c0_i32, %c0_i32_0 : i32, i32
  }
  func.func @transform_8(%arg0: i32) -> (i32, i32) {
    %c0_i32 = arith.constant 0 : i32
    %c0_i32_0 = arith.constant 0 : i32
    %c0_i32_1 = arith.constant 0 : i32
    return %c0_i32, %c0_i32_0 : i32, i32
  }
  func.func @transform_9(%arg0: i32) -> (i32, i32) {
    %c0_i32 = arith.constant 0 : i32
    %c0_i32_0 = arith.constant 0 : i32
    %c0_i32_1 = arith.constant 0 : i32
    return %c0_i32, %c0_i32_0 : i32, i32
  }
  func.func @transform_10(%arg0: i32) -> (i32, i32) {
    %c0_i32 = arith.constant 0 : i32
    %c0_i32_0 = arith.constant 0 : i32
    %c0_i32_1 = arith.constant 0 : i32
    return %c0_i32, %c0_i32_0 : i32, i32
  }
  func.func @transform_11(%arg0: i32) -> (i32, i32) {
    %c0_i32 = arith.constant 0 : i32
    %c0_i32_0 = arith.constant 0 : i32
    return %arg0, %c0_i32 : i32, i32
  }
}

</mosaic_0001>

<llo_original>
// kernel: tpu_custom_call.1
$region0: #{tpu_custom_call.1}
  #allocation0 [shape = 'u32[]', space=smem, size = 0x4, offset = 0x4, fixed_abs, tag = 'smem constant byte address 0x4 - core index']
  #allocation1 [shape = 'u32[144,128]{1,0:T(1,128)}', space=vmem, size = 0x12000, scoped, tag = 'internal scratch']
  %s0 = inlined_call_operand.hbm [shape: bf16[2,1024], index: 0, kind: input, shape index: {}]
  %s1 = inlined_call_operand.hbm [shape: bf16[1024,256], index: 1, kind: input, shape index: {}]
  %s2 = inlined_call_operand.hbm [shape: f32[1,256], index: 2, kind: input, shape index: {}]
  %s3 = inlined_call_operand.hbm [shape: bf16[256,256], index: 3, kind: input, shape index: {}]
  %s4 = inlined_call_operand.hbm [shape: f32[1,256], index: 4, kind: input, shape index: {}]
  %s5 = inlined_call_operand.hbm [shape: bf16[256,256], index: 5, kind: input, shape index: {}]
  %s6 = inlined_call_operand.hbm [shape: f32[1,256], index: 6, kind: input, shape index: {}]
  %s7 = inlined_call_operand.hbm [shape: bf16[256,128], index: 7, kind: input, shape index: {}]
  %s8 = inlined_call_operand.hbm [shape: f32[1,128], index: 8, kind: input, shape index: {}]
  %s9 = inlined_call_operand.hbm [shape: bf16[128,128], index: 9, kind: input, shape index: {}]
  %s10 = inlined_call_operand.hbm [shape: f32[1,128], index: 10, kind: input, shape index: {}]
  %s11 = inlined_call_operand.hbm [shape: f32[2,128], index: 11, kind: output, shape index: {}]
  %s12 = sld [smem:[#allocation0]]
  $region98: #{tpu_custom_call.1} parent=0
    _
  %s14 = ssub.s32 1, %s12
  %s15 = scalar_select 0, %s14, %s12
  $region1: #{tpu_custom_call.1} parent=0
    #allocation2 [shape = 'u8[16384]{0}', space=vmem, size = 0x4000, scoped, tag = 'input window, operand 0, single buffered']
    #allocation3 [shape = 's32[1]{0}', space=sflag, size = 0x4, scoped, tag = 'scoped memory for tpu_custom_call.1']
    #allocation4 [shape = 's32[1]{0}', space=sflag, size = 0x4, scoped, tag = 'scoped memory for tpu_custom_call.1']
    #allocation5 [shape = 'u8[524288]{0}', space=vmem, size = 0x80000, scoped, tag = 'input window, operand 1, single buffered']
    #allocation6 [shape = 's32[1]{0}', space=sflag, size = 0x4, scoped, tag = 'scoped memory for tpu_custom_call.1']
    #allocation7 [shape = 'u8[1024]{0}', space=vmem, size = 0x400, scoped, tag = 'input window, operand 2, single buffered']
    #allocation8 [shape = 'u8[131072]{0}', space=vmem, size = 0x20000, scoped, tag = 'input window, operand 3, single buffered']
    #allocation9 [shape = 's32[1]{0}', space=sflag, size = 0x4, scoped, tag = 'scoped memory for tpu_custom_call.1']
    #allocation10 [shape = 'u8[1024]{0}', space=vmem, size = 0x400, scoped, tag = 'input window, operand 4, single buffered']
    #allocation11 [shape = 'u8[131072]{0}', space=vmem, size = 0x20000, scoped, tag = 'input window, operand 5, single buffered']
    #allocation12 [shape = 's32[1]{0}', space=sflag, size = 0x4, scoped, tag = 'scoped memory for tpu_custom_call.1']
    #allocation13 [shape = 'u8[1024]{0}', space=vmem, size = 0x400, scoped, tag = 'input window, operand 6, single buffered']
    #allocation14 [shape = 'u8[65536]{0}', space=vmem, size = 0x10000, scoped, tag = 'input window, operand 7, single buffered']
    #allocation15 [shape = 's32[1]{0}', space=sflag, size = 0x4, scoped, tag = 'scoped memory for tpu_custom_call.1']
    #allocation16 [shape = 'u8[512]{0}', space=vmem, size = 0x400, scoped, tag = 'input window, operand 8, single buffered']
    #allocation17 [shape = 'u8[32768]{0}', space=vmem, size = 0x8000, scoped, tag = 'input window, operand 9, single buffered']
    #allocation18 [shape = 's32[1]{0}', space=sflag, size = 0x4, scoped, tag = 'scoped memory for tpu_custom_call.1']
    #allocation19 [shape = 'u8[512]{0}', space=vmem, size = 0x400, scoped, tag = 'input window, operand 10, single buffered']
    #allocation20 [shape = 'u8[4096]{0}', space=vmem, size = 0x1000, scoped, tag = 'output window, operand 0, single buffered']
    %16 = vsyncpa [#allocation3], 0
    %17 = vsyncpa [#allocation6], 0
    %18 = vsyncpa [#allocation9], 0
    %19 = vsyncpa [#allocation12], 0
    %20 = vsyncpa [#allocation15], 0
    %21 = vsyncpa [#allocation18], 0
    %22 = vsyncpa [#allocation4], 0
    // Predicated region
    $region2: #{tpu_custom_call.1} parent=1 // pred_check
      _
    $region3: #{tpu_custom_call.1} parent=1 // pred_check_branch
      %24 = sbr.rel (0) target = $region5
    $region4: #{tpu_custom_call.1} parent=1 // pred_region
      %s26 = ssub.s32 512, 128
      %27 = vsyncadd [#allocation3], %s26
      %s28 = sshll.u32 [#allocation2], 4
      %s29 = int_to_ptr.vmem [resolvable:$true] %s28
      %34 = dma.hbm_to_vmem [thread:$0]  %s0, 128, %s29, [#allocation3], 128, 128, 8
    $region5: #{tpu_custom_call.1} parent=1 // pred_fallthru
      _
    // Predicated region
    $region6: #{tpu_custom_call.1} parent=1 // pred_check
      _
    $region7: #{tpu_custom_call.1} parent=1 // pred_check_branch
      %36 = sbr.rel (0) target = $region9
    $region8: #{tpu_custom_call.1} parent=1 // pred_region
      %s38 = ssub.s32 16384, 16384
      %39 = vsyncadd [#allocation6], %s38
      %s40 = sshll.u32 [#allocation5], 4
      %s41 = int_to_ptr.vmem [resolvable:$true] %s40
      %46 = dma.hbm_to_vmem [thread:$0]  %s1, 16384, %s41, [#allocation6], 128, 128, 8
    $region9: #{tpu_custom_call.1} parent=1 // pred_fallthru
      _
    // Predicated region
    $region10: #{tpu_custom_call.1} parent=1 // pred_check
      _
    $region11: #{tpu_custom_call.1} parent=1 // pred_check_branch
      %48 = sbr.rel (0) target = $region13
    $region12: #{tpu_custom_call.1} parent=1 // pred_region
      %s50 = ssub.s32 32, 32
      %51 = vsyncadd [#allocation6], %s50
      %s53 = sshll.u32 [#allocation7], 4
      %s54 = int_to_ptr.vmem [resolvable:$true] %s53
      %56 = dma.hbm_to_vmem [thread:$0]  %s2, 32, %s54, [#allocation6]
    $region13: #{tpu_custom_call.1} parent=1 // pred_fallthru
      _
    // Predicated region
    $region14: #{tpu_custom_call.1} parent=1 // pred_check
      _
    $region15: #{tpu_custom_call.1} parent=1 // pred_check_branch
      %58 = sbr.rel (0) target = $region17
    $region16: #{tpu_custom_call.1} parent=1 // pred_region
      %s60 = ssub.s32 4096, 4096
      %61 = vsyncadd [#allocation9], %s60
      %s62 = sshll.u32 [#allocation8], 4
      %s63 = int_to_ptr.vmem [resolvable:$true] %s62
      %68 = dma.hbm_to_vmem [thread:$0]  %s3, 4096, %s63, [#allocation9], 128, 128, 8
    $region17: #{tpu_custom_call.1} parent=1 // pred_fallthru
      _
    // Predicated region
    $region18: #{tpu_custom_call.1} parent=1 // pred_check
      _
    $region19: #{tpu_custom_call.1} parent=1 // pred_check_branch
      %70 = sbr.rel (0) target = $region21
    $region20: #{tpu_custom_call.1} parent=1 // pred_region
      %s72 = ssub.s32 32, 32
      %73 = vsyncadd [#allocation9], %s72
      %s75 = sshll.u32 [#allocation10], 4
      %s76 = int_to_ptr.vmem [resolvable:$true] %s75
      %78 = dma.hbm_to_vmem [thread:$0]  %s4, 32, %s76, [#allocation9]
    $region21: #{tpu_custom_call.1} parent=1 // pred_fallthru
      _
    // Predicated region
    $region22: #{tpu_custom_call.1} parent=1 // pred_check
      _
    $region23: #{tpu_custom_call.1} parent=1 // pred_check_branch
      %80 = sbr.rel (0) target = $region25
    $region24: #{tpu_custom_call.1} parent=1 // pred_region
      %s82 = ssub.s32 4096, 4096
      %83 = vsyncadd [#allocation12], %s82
      %s84 = sshll.u32 [#allocation11], 4
      %s85 = int_to_ptr.vmem [resolvable:$true] %s84
      %90 = dma.hbm_to_vmem [thread:$0]  %s5, 4096, %s85, [#allocation12], 128, 128, 8
    $region25: #{tpu_custom_call.1} parent=1 // pred_fallthru
      _
    // Predicated region
    $region26: #{tpu_custom_call.1} parent=1 // pred_check
      _
    $region27: #{tpu_custom_call.1} parent=1 // pred_check_branch
      %92 = sbr.rel (0) target = $region29
    $region28: #{tpu_custom_call.1} parent=1 // pred_region
      %s94 = ssub.s32 32, 32
      %95 = vsyncadd [#allocation12], %s94
      %s97 = sshll.u32 [#allocation13], 4
      %s98 = int_to_ptr.vmem [resolvable:$true] %s97
      %100 = dma.hbm_to_vmem [thread:$0]  %s6, 32, %s98, [#allocation12]
    $region29: #{tpu_custom_call.1} parent=1 // pred_fallthru
      _
    // Predicated region
    $region30: #{tpu_custom_call.1} parent=1 // pred_check
      _
    $region31: #{tpu_custom_call.1} parent=1 // pred_check_branch
      %102 = sbr.rel (0) target = $region33
    $region32: #{tpu_custom_call.1} parent=1 // pred_region
      %s104 = ssub.s32 2048, 2048
      %105 = vsyncadd [#allocation15], %s104
      %s106 = sshll.u32 [#allocation14], 4
      %s107 = int_to_ptr.vmem [resolvable:$true] %s106
      %112 = dma.hbm_to_vmem [thread:$0]  %s7, 2048, %s107, [#allocation15], 64, 64, 4
    $region33: #{tpu_custom_call.1} parent=1 // pred_fallthru
      _
    // Predicated region
    $region34: #{tpu_custom_call.1} parent=1 // pred_check
      _
    $region35: #{tpu_custom_call.1} parent=1 // pred_check_branch
      %114 = sbr.rel (0) target = $region37
    $region36: #{tpu_custom_call.1} parent=1 // pred_region
      %s116 = ssub.s32 16, 16
      %117 = vsyncadd [#allocation15], %s116
      %s119 = sshll.u32 [#allocation16], 4
      %s120 = int_to_ptr.vmem [resolvable:$true] %s119
      %122 = dma.hbm_to_vmem [thread:$0]  %s8, 16, %s120, [#allocation15]
    $region37: #{tpu_custom_call.1} parent=1 // pred_fallthru
      _
    // Predicated region
    $region38: #{tpu_custom_call.1} parent=1 // pred_check
      _
    $region39: #{tpu_custom_call.1} parent=1 // pred_check_branch
      %124 = sbr.rel (0) target = $region41
    $region40: #{tpu_custom_call.1} parent=1 // pred_region
      %s126 = ssub.s32 1024, 1024
      %127 = vsyncadd [#allocation18], %s126
      %s128 = sshll.u32 [#allocation17], 4
      %s129 = int_to_ptr.vmem [resolvable:$true] %s128
      %134 = dma.hbm_to_vmem [thread:$0]  %s9, 1024, %s129, [#allocation18], 64, 64, 4
    $region41: #{tpu_custom_call.1} parent=1 // pred_fallthru
      _
    // Predicated region
    $region42: #{tpu_custom_call.1} parent=1 // pred_check
      _
    $region43: #{tpu_custom_call.1} parent=1 // pred_check_branch
      %136 = sbr.rel (0) target = $region45
    $region44: #{tpu_custom_call.1} parent=1 // pred_region
      %s138 = ssub.s32 16, 16
      %139 = vsyncadd [#allocation18], %s138
      %s141 = sshll.u32 [#allocation19], 4
      %s142 = int_to_ptr.vmem [resolvable:$true] %s141
      %144 = dma.hbm_to_vmem [thread:$0]  %s10, 16, %s142, [#allocation18]
    $region45: #{tpu_custom_call.1} parent=1 // pred_fallthru
      _
    // Predicated region
    $region46: #{tpu_custom_call.1} parent=1 // pred_check
      _
    $region47: #{tpu_custom_call.1} parent=1 // pred_check_branch
      %146 = sbr.rel (0) target = $region49
    $region48: #{tpu_custom_call.1} parent=1 // pred_region
      %147 = dma.done [#allocation3], 512
    $region49: #{tpu_custom_call.1} parent=1 // pred_fallthru
      _
    // Predicated region
    $region50: #{tpu_custom_call.1} parent=1 // pred_check
      _
    $region51: #{tpu_custom_call.1} parent=1 // pred_check_branch
      %149 = sbr.rel (0) target = $region53
    $region52: #{tpu_custom_call.1} parent=1 // pred_region
      %150 = dma.done [#allocation6], 16384
    $region53: #{tpu_custom_call.1} parent=1 // pred_fallthru
      _
    // Predicated region
    $region54: #{tpu_custom_call.1} parent=1 // pred_check
      _
    $region55: #{tpu_custom_call.1} parent=1 // pred_check_branch
      %152 = sbr.rel (0) target = $region57
    $region56: #{tpu_custom_call.1} parent=1 // pred_region
      %153 = dma.done [#allocation6], 32
    $region57: #{tpu_custom_call.1} parent=1 // pred_fallthru
      _
    // Predicated region
    $region58: #{tpu_custom_call.1} parent=1 // pred_check
      _
    $region59: #{tpu_custom_call.1} parent=1 // pred_check_branch
      %155 = sbr.rel (0) target = $region61
    $region60: #{tpu_custom_call.1} parent=1 // pred_region
      %156 = dma.done [#allocation9], 4096
    $region61: #{tpu_custom_call.1} parent=1 // pred_fallthru
      _
    // Predicated region
    $region62: #{tpu_custom_call.1} parent=1 // pred_check
      _
    $region63: #{tpu_custom_call.1} parent=1 // pred_check_branch
      %158 = sbr.rel (0) target = $region65
    $region64: #{tpu_custom_call.1} parent=1 // pred_region
      %159 = dma.done [#allocation9], 32
    $region65: #{tpu_custom_call.1} parent=1 // pred_fallthru
      _
    // Predicated region
    $region66: #{tpu_custom_call.1} parent=1 // pred_check
      _
    $region67: #{tpu_custom_call.1} parent=1 // pred_check_branch
      %161 = sbr.rel (0) target = $region69
    $region68: #{tpu_custom_call.1} parent=1 // pred_region
      %162 = dma.done [#allocation12], 4096
    $region69: #{tpu_custom_call.1} parent=1 // pred_fallthru
      _
    // Predicated region
    $region70: #{tpu_custom_call.1} parent=1 // pred_check
      _
    $region71: #{tpu_custom_call.1} parent=1 // pred_check_branch
      %164 = sbr.rel (0) target = $region73
    $region72: #{tpu_custom_call.1} parent=1 // pred_region
      %165 = dma.done [#allocation12], 32
    $region73: #{tpu_custom_call.1} parent=1 // pred_fallthru
      _
    // Predicated region
    $region74: #{tpu_custom_call.1} parent=1 // pred_check
      _
    $region75: #{tpu_custom_call.1} parent=1 // pred_check_branch
      %167 = sbr.rel (0) target = $region77
    $region76: #{tpu_custom_call.1} parent=1 // pred_region
      %168 = dma.done [#allocation15], 2048
    $region77: #{tpu_custom_call.1} parent=1 // pred_fallthru
      _
    // Predicated region
    $region78: #{tpu_custom_call.1} parent=1 // pred_check
      _
    $region79: #{tpu_custom_call.1} parent=1 // pred_check_branch
      %170 = sbr.rel (0) target = $region81
    $region80: #{tpu_custom_call.1} parent=1 // pred_region
      %171 = dma.done [#allocation15], 16
    $region81: #{tpu_custom_call.1} parent=1 // pred_fallthru
      _
    // Predicated region
    $region82: #{tpu_custom_call.1} parent=1 // pred_check
      _
    $region83: #{tpu_custom_call.1} parent=1 // pred_check_branch
      %173 = sbr.rel (0) target = $region85
    $region84: #{tpu_custom_call.1} parent=1 // pred_region
      %174 = dma.done [#allocation18], 1024
    $region85: #{tpu_custom_call.1} parent=1 // pred_fallthru
      _
    // Predicated region
    $region86: #{tpu_custom_call.1} parent=1 // pred_check
      _
    $region87: #{tpu_custom_call.1} parent=1 // pred_check_branch
      %176 = sbr.rel (0) target = $region89
    $region88: #{tpu_custom_call.1} parent=1 // pred_region
      %177 = dma.done [#allocation18], 16
    $region89: #{tpu_custom_call.1} parent=1 // pred_fallthru
      _
    %v180 = vld [vmem:[#allocation2] sm:$0xff]
    %v181 = vld [vmem:[#allocation2 + $0x8] sm:$0xff]
    %v182 = vld [vmem:[#allocation2 + $0x10] sm:$0xff]
    %v183 = vld [vmem:[#allocation2 + $0x18] sm:$0xff]
    %s184 = smul.u32 0, 8
    %v185 = vlaneseq
    %v186 = vshrl.u32 %v185, 7
    %v187 = vstv %s184
    %v188 = vadd.s32 %v187, %v186
    %vm189 = vcmp.lt.s32.totalorder %v188, 2
    %v190 = vsel %vm189, 1, 0
    %vm191 = vcmp.eq.s32.totalorder %v190, 1
    %v192 = vsel %vm191, 1, 0
    %v194 = vunpack.c.l.s4 269488144
    %v195 = vunpack.c.0.s8 %v194
    %v196 = vlaneseq
    %v197 = vshrl.u32 %v196, 7
    %v198 = vsub.s32 %v195, %v197
    %v199 = vrot.slane %v192, %v198
    %v201 = vunpack.c.l.s4 842150450
    %v202 = vunpack.c.0.s8 %v201
    %v203 = vlaneseq
    %v204 = vshrl.u32 %v203, 7
    %v205 = vsub.s32 %v202, %v204
    %v206 = vrot.slane %v192, %v205
    %v208 = vunpack.c.l.s4 1414812756
    %v209 = vunpack.c.0.s8 %v208
    %v210 = vlaneseq
    %v211 = vshrl.u32 %v210, 7
    %v212 = vsub.s32 %v209, %v211
    %v213 = vrot.slane %v192, %v212
    %v215 = vunpack.c.l.s4 1987475062
    %v216 = vunpack.c.0.s8 %v215
    %v217 = vlaneseq
    %v218 = vshrl.u32 %v217, 7
    %v219 = vsub.s32 %v216, %v218
    %v220 = vrot.slane %v192, %v219
    %vm221 = vcmp.ne.s32.totalorder %v199, 0
    %vm222 = vcmp.ne.s32.totalorder %v206, 0
    %vm223 = vcmp.ne.s32.totalorder %v213, 0
    %vm224 = vcmp.ne.s32.totalorder %v220, 0
    %v225 = vsel %vm221, 1, 0
    %v226 = vsel %vm222, 1, 0
    %v227 = vsel %vm223, 1, 0
    %v228 = vsel %vm224, 1, 0
    %v229 = vpack.c.b16 %v225, %v225
    %v230 = vpack.c.b16 %v226, %v226
    %v231 = vpack.c.b16 %v227, %v227
    %v232 = vpack.c.b16 %v228, %v228
    %vm233 = vcmp.ne.s16.totalorder %v229, 0
    %vm234 = vcmp.ne.s16.totalorder %v230, 0
    %vm235 = vcmp.ne.s16.totalorder %v231, 0
    %vm236 = vcmp.ne.s16.totalorder %v232, 0
    %v237 = vsel %vm233, %v180, 0
    %v238 = vsel %vm234, %v181, 0
    %v239 = vsel %vm235, %v182, 0
    %v240 = vsel %vm236, %v183, 0
    %v241 = vld [vmem:[#allocation5] sm:$0xff]
    %v242 = vld [vmem:[#allocation5 + $0x8] sm:$0xff]
    %v243 = vld [vmem:[#allocation5 + $0x10] sm:$0xff]
    %v244 = vld [vmem:[#allocation5 + $0x18] sm:$0xff]
    %v245 = vld [vmem:[#allocation5 + $0x20] sm:$0xff]
    %v246 = vld [vmem:[#allocation5 + $0x28] sm:$0xff]
    %v247 = vld [vmem:[#allocation5 + $0x30] sm:$0xff]
    %v248 = vld [vmem:[#allocation5 + $0x38] sm:$0xff]
    %v249 = vld [vmem:[#allocation5 + $0x40] sm:$0xff]
    %v250 = vld [vmem:[#allocation5 + $0x48] sm:$0xff]
    %v251 = vld [vmem:[#allocation5 + $0x50] sm:$0xff]
    %v252 = vld [vmem:[#allocation5 + $0x58] sm:$0xff]
    %v253 = vld [vmem:[#allocation5 + $0x60] sm:$0xff]
    %v254 = vld [vmem:[#allocation5 + $0x68] sm:$0xff]
    %v255 = vld [vmem:[#allocation5 + $0x70] sm:$0xff]
    %v256 = vld [vmem:[#allocation5 + $0x78] sm:$0xff]
    %v257 = vld [vmem:[#allocation5 + $0x80] sm:$0xff]
    %v258 = vld [vmem:[#allocation5 + $0x88] sm:$0xff]
    %v259 = vld [vmem:[#allocation5 + $0x90] sm:$0xff]
    %v260 = vld [vmem:[#allocation5 + $0x98] sm:$0xff]
    %v261 = vld [vmem:[#allocation5 + $0xa0] sm:$0xff]
    %v262 = vld [vmem:[#allocation5 + $0xa8] sm:$0xff]
    %v263 = vld [vmem:[#allocation5 + $0xb0] sm:$0xff]
    %v264 = vld [vmem:[#allocation5 + $0xb8] sm:$0xff]
    %v265 = vld [vmem:[#allocation5 + $0xc0] sm:$0xff]
    %v266 = vld [vmem:[#allocation5 + $0xc8] sm:$0xff]
    %v267 = vld [vmem:[#allocation5 + $0xd0] sm:$0xff]
    %v268 = vld [vmem:[#allocation5 + $0xd8] sm:$0xff]
    %v269 = vld [vmem:[#allocation5 + $0xe0] sm:$0xff]
    %v270 = vld [vmem:[#allocation5 + $0xe8] sm:$0xff]
    %v271 = vld [vmem:[#allocation5 + $0xf0] sm:$0xff]
    %v272 = vld [vmem:[#allocation5 + $0xf8] sm:$0xff]
    %v273 = vld [vmem:[#allocation5 + $0x100] sm:$0xff]
    %v274 = vld [vmem:[#allocation5 + $0x108] sm:$0xff]
    %v275 = vld [vmem:[#allocation5 + $0x110] sm:$0xff]
    %v276 = vld [vmem:[#allocation5 + $0x118] sm:$0xff]
    %v277 = vld [vmem:[#allocation5 + $0x120] sm:$0xff]
    %v278 = vld [vmem:[#allocation5 + $0x128] sm:$0xff]
    %v279 = vld [vmem:[#allocation5 + $0x130] sm:$0xff]
    %v280 = vld [vmem:[#allocation5 + $0x138] sm:$0xff]
    %v281 = vld [vmem:[#allocation5 + $0x140] sm:$0xff]
    %v282 = vld [vmem:[#allocation5 + $0x148] sm:$0xff]
    %v283 = vld [vmem:[#allocation5 + $0x150] sm:$0xff]
    %v284 = vld [vmem:[#allocation5 + $0x158] sm:$0xff]
    %v285 = vld [vmem:[#allocation5 + $0x160] sm:$0xff]
    %v286 = vld [vmem:[#allocation5 + $0x168] sm:$0xff]
    %v287 = vld [vmem:[#allocation5 + $0x170] sm:$0xff]
    %v288 = vld [vmem:[#allocation5 + $0x178] sm:$0xff]
    %v289 = vld [vmem:[#allocation5 + $0x180] sm:$0xff]
    %v290 = vld [vmem:[#allocation5 + $0x188] sm:$0xff]
    %v291 = vld [vmem:[#allocation5 + $0x190] sm:$0xff]
    %v292 = vld [vmem:[#allocation5 + $0x198] sm:$0xff]
    %v293 = vld [vmem:[#allocation5 + $0x1a0] sm:$0xff]
    %v294 = vld [vmem:[#allocation5 + $0x1a8] sm:$0xff]
    %v295 = vld [vmem:[#allocation5 + $0x1b0] sm:$0xff]
    %v296 = vld [vmem:[#allocation5 + $0x1b8] sm:$0xff]
    %v297 = vld [vmem:[#allocation5 + $0x1c0] sm:$0xff]
    %v298 = vld [vmem:[#allocation5 + $0x1c8] sm:$0xff]
    %v299 = vld [vmem:[#allocation5 + $0x1d0] sm:$0xff]
    %v300 = vld [vmem:[#allocation5 + $0x1d8] sm:$0xff]
    %v301 = vld [vmem:[#allocation5 + $0x1e0] sm:$0xff]
    %v302 = vld [vmem:[#allocation5 + $0x1e8] sm:$0xff]
    %v303 = vld [vmem:[#allocation5 + $0x1f0] sm:$0xff]
    %v304 = vld [vmem:[#allocation5 + $0x1f8] sm:$0xff]
    %v305 = vld [vmem:[#allocation5 + $0x200] sm:$0xff]
    %v306 = vld [vmem:[#allocation5 + $0x208] sm:$0xff]
    %v307 = vld [vmem:[#allocation5 + $0x210] sm:$0xff]
    %v308 = vld [vmem:[#allocation5 + $0x218] sm:$0xff]
    %v309 = vld [vmem:[#allocation5 + $0x220] sm:$0xff]
    %v310 = vld [vmem:[#allocation5 + $0x228] sm:$0xff]
    %v311 = vld [vmem:[#allocation5 + $0x230] sm:$0xff]
    %v312 = vld [vmem:[#allocation5 + $0x238] sm:$0xff]
    %v313 = vld [vmem:[#allocation5 + $0x240] sm:$0xff]
    %v314 = vld [vmem:[#allocation5 + $0x248] sm:$0xff]
    %v315 = vld [vmem:[#allocation5 + $0x250] sm:$0xff]
    %v316 = vld [vmem:[#allocation5 + $0x258] sm:$0xff]
    %v317 = vld [vmem:[#allocation5 + $0x260] sm:$0xff]
    %v318 = vld [vmem:[#allocation5 + $0x268] sm:$0xff]
    %v319 = vld [vmem:[#allocation5 + $0x270] sm:$0xff]
    %v320 = vld [vmem:[#allocation5 + $0x278] sm:$0xff]
    %v321 = vld [vmem:[#allocation5 + $0x280] sm:$0xff]
    %v322 = vld [vmem:[#allocation5 + $0x288] sm:$0xff]
    %v323 = vld [vmem:[#allocation5 + $0x290] sm:$0xff]
    %v324 = vld [vmem:[#allocation5 + $0x298] sm:$0xff]
    %v325 = vld [vmem:[#allocation5 + $0x2a0] sm:$0xff]
    %v326 = vld [vmem:[#allocation5 + $0x2a8] sm:$0xff]
    %v327 = vld [vmem:[#allocation5 + $0x2b0] sm:$0xff]
    %v328 = vld [vmem:[#allocation5 + $0x2b8] sm:$0xff]
    %v329 = vld [vmem:[#allocation5 + $0x2c0] sm:$0xff]
    %v330 = vld [vmem:[#allocation5 + $0x2c8] sm:$0xff]
    %v331 = vld [vmem:[#allocation5 + $0x2d0] sm:$0xff]
    %v332 = vld [vmem:[#allocation5 + $0x2d8] sm:$0xff]
    %v333 = vld [vmem:[#allocation5 + $0x2e0] sm:$0xff]
    %v334 = vld [vmem:[#allocation5 + $0x2e8] sm:$0xff]
    %v335 = vld [vmem:[#allocation5 + $0x2f0] sm:$0xff]
    %v336 = vld [vmem:[#allocation5 + $0x2f8] sm:$0xff]
    %v337 = vld [vmem:[#allocation5 + $0x300] sm:$0xff]
    %v338 = vld [vmem:[#allocation5 + $0x308] sm:$0xff]
    %v339 = vld [vmem:[#allocation5 + $0x310] sm:$0xff]
    %v340 = vld [vmem:[#allocation5 + $0x318] sm:$0xff]
    %v341 = vld [vmem:[#allocation5 + $0x320] sm:$0xff]
    %v342 = vld [vmem:[#allocation5 + $0x328] sm:$0xff]
    %v343 = vld [vmem:[#allocation5 + $0x330] sm:$0xff]
    %v344 = vld [vmem:[#allocation5 + $0x338] sm:$0xff]
    %v345 = vld [vmem:[#allocation5 + $0x340] sm:$0xff]
    %v346 = vld [vmem:[#allocation5 + $0x348] sm:$0xff]
    %v347 = vld [vmem:[#allocation5 + $0x350] sm:$0xff]
    %v348 = vld [vmem:[#allocation5 + $0x358] sm:$0xff]
    %v349 = vld [vmem:[#allocation5 + $0x360] sm:$0xff]
    %v350 = vld [vmem:[#allocation5 + $0x368] sm:$0xff]
    %v351 = vld [vmem:[#allocation5 + $0x370] sm:$0xff]
    %v352 = vld [vmem:[#allocation5 + $0x378] sm:$0xff]
    %v353 = vld [vmem:[#allocation5 + $0x380] sm:$0xff]
    %v354 = vld [vmem:[#allocation5 + $0x388] sm:$0xff]
    %v355 = vld [vmem:[#allocation5 + $0x390] sm:$0xff]
    %v356 = vld [vmem:[#allocation5 + $0x398] sm:$0xff]
    %v357 = vld [vmem:[#allocation5 + $0x3a0] sm:$0xff]
    %v358 = vld [vmem:[#allocation5 + $0x3a8] sm:$0xff]
    %v359 = vld [vmem:[#allocation5 + $0x3b0] sm:$0xff]
    %v360 = vld [vmem:[#allocation5 + $0x3b8] sm:$0xff]
    %v361 = vld [vmem:[#allocation5 + $0x3c0] sm:$0xff]
    %v362 = vld [vmem:[#allocation5 + $0x3c8] sm:$0xff]
    %v363 = vld [vmem:[#allocation5 + $0x3d0] sm:$0xff]
    %v364 = vld [vmem:[#allocation5 + $0x3d8] sm:$0xff]
    %v365 = vld [vmem:[#allocation5 + $0x3e0] sm:$0xff]
    %v366 = vld [vmem:[#allocation5 + $0x3e8] sm:$0xff]
    %v367 = vld [vmem:[#allocation5 + $0x3f0] sm:$0xff]
    %v368 = vld [vmem:[#allocation5 + $0x3f8] sm:$0xff]
    %v369 = vld [vmem:[#allocation7] sm:$0x3]
    %v371 = vlaneseq
    %v372 = vshrl.u32 %v371, 7
    %v373 = vsub.s32 0, %v372
    %v374 = vrot.slane %v369, %v373
    %v375 = vlaneseq
    %v376 = vshrl.u32 %v375, 7
    %v377 = vsub.s32 1, %v376
    %v378 = vrot.slane %v369, %v377
    %v385 = vcombine.low %v237, %v238
    %v386 = vcombine.high %v237, %v238
    %v387 = vcombine.low %v239, %v240
    %v388 = vcombine.high %v239, %v240
    %v390 = vunpack.c.l.s4 1966171168
    %v391 = vunpack.c.0.s8 %v390
    %v392 = vlaneseq
    %v393 = vshrl.u32 %v392, 7
    %v394 = vsub.s32 %v391, %v393
    %v395 = vrot.slane %v385, %v394
    %v397 = vunpack.c.l.s4 1966171168
    %v398 = vunpack.c.0.s8 %v397
    %v399 = vlaneseq
    %v400 = vshrl.u32 %v399, 7
    %v401 = vsub.s32 %v398, %v400
    %v402 = vrot.slane %v386, %v401
    %v404 = vunpack.c.l.s4 1966171168
    %v405 = vunpack.c.0.s8 %v404
    %v406 = vlaneseq
    %v407 = vshrl.u32 %v406, 7
    %v408 = vsub.s32 %v405, %v407
    %v409 = vrot.slane %v387, %v408
    %v411 = vunpack.c.l.s4 1966171168
    %v412 = vunpack.c.0.s8 %v411
    %v413 = vlaneseq
    %v414 = vshrl.u32 %v413, 7
    %v415 = vsub.s32 %v412, %v414
    %v416 = vrot.slane %v388, %v415
    %v417 = vcombine.low %v395, %v409
    %v418 = vcombine.high %v395, %v409
    %v419 = vcombine.low %v402, %v416
    %v420 = vcombine.high %v402, %v416
    %v422 = vunpack.c.l.s4 1966171168
    %v423 = vunpack.c.0.s8 %v422
    %v424 = vlaneseq
    %v425 = vshrl.u32 %v424, 7
    %v426 = vsub.s32 %v423, %v425
    %v427 = vrot.slane %v417, %v426
    %v429 = vunpack.c.l.s4 1966171168
    %v430 = vunpack.c.0.s8 %v429
    %v431 = vlaneseq
    %v432 = vshrl.u32 %v431, 7
    %v433 = vsub.s32 %v430, %v432
    %v434 = vrot.slane %v419, %v433
    %v436 = vunpack.c.l.s4 1966171168
    %v437 = vunpack.c.0.s8 %v436
    %v438 = vlaneseq
    %v439 = vshrl.u32 %v438, 7
    %v440 = vsub.s32 %v437, %v439
    %v441 = vrot.slane %v418, %v440
    %v443 = vunpack.c.l.s4 1966171168
    %v444 = vunpack.c.0.s8 %v443
    %v445 = vlaneseq
    %v446 = vshrl.u32 %v445, 7
    %v447 = vsub.s32 %v444, %v446
    %v448 = vrot.slane %v420, %v447
    %v449 = vcombine.high %v427, %v427
    %v450 = vcombine.high %v434, %v434
    %v451 = vcombine.high %v441, %v441
    %v452 = vcombine.high %v448, %v448
    %v589 = vunpack.c.l.b16 %v241
    %v590 = vunpack.c.h.b16 %v241
    %v591 = vunpack.c.l.b16 %v242
    %v592 = vunpack.c.h.b16 %v242
    %v593 = vunpack.c.l.b16 %v243
    %v594 = vunpack.c.h.b16 %v243
    %v595 = vunpack.c.l.b16 %v244
    %v596 = vunpack.c.h.b16 %v244
    %v597 = vunpack.c.l.b16 %v245
    %v598 = vunpack.c.h.b16 %v245
    %v599 = vunpack.c.l.b16 %v246
    %v600 = vunpack.c.h.b16 %v246
    %v601 = vunpack.c.l.b16 %v247
    %v602 = vunpack.c.h.b16 %v247
    %v603 = vunpack.c.l.b16 %v248
    %v604 = vunpack.c.h.b16 %v248
    %v605 = vunpack.c.l.b16 %v249
    %v606 = vunpack.c.h.b16 %v249
    %v607 = vunpack.c.l.b16 %v250
    %v608 = vunpack.c.h.b16 %v250
    %v609 = vunpack.c.l.b16 %v251
    %v610 = vunpack.c.h.b16 %v251
    %v611 = vunpack.c.l.b16 %v252
    %v612 = vunpack.c.h.b16 %v252
    %v613 = vunpack.c.l.b16 %v253
    %v614 = vunpack.c.h.b16 %v253
    %v615 = vunpack.c.l.b16 %v254
    %v616 = vunpack.c.h.b16 %v254
    %v617 = vunpack.c.l.b16 %v255
    %v618 = vunpack.c.h.b16 %v255
    %v619 = vunpack.c.l.b16 %v256
    %v620 = vunpack.c.h.b16 %v256
    %v621 = vunpack.c.l.b16 %v257
    %v622 = vunpack.c.h.b16 %v257
    %v623 = vunpack.c.l.b16 %v258
    %v624 = vunpack.c.h.b16 %v258
    %v625 = vunpack.c.l.b16 %v259
    %v626 = vunpack.c.h.b16 %v259
    %v627 = vunpack.c.l.b16 %v260
    %v628 = vunpack.c.h.b16 %v260
    %v629 = vunpack.c.l.b16 %v261
    %v630 = vunpack.c.h.b16 %v261
    %v631 = vunpack.c.l.b16 %v262
    %v632 = vunpack.c.h.b16 %v262
    %v633 = vunpack.c.l.b16 %v263
    %v634 = vunpack.c.h.b16 %v263
    %v635 = vunpack.c.l.b16 %v264
    %v636 = vunpack.c.h.b16 %v264
    %v637 = vunpack.c.l.b16 %v265
    %v638 = vunpack.c.h.b16 %v265
    %v639 = vunpack.c.l.b16 %v266
    %v640 = vunpack.c.h.b16 %v266
    %v641 = vunpack.c.l.b16 %v267
    %v642 = vunpack.c.h.b16 %v267
    %v643 = vunpack.c.l.b16 %v268
    %v644 = vunpack.c.h.b16 %v268
    %v645 = vunpack.c.l.b16 %v269
    %v646 = vunpack.c.h.b16 %v269
    %v647 = vunpack.c.l.b16 %v270
    %v648 = vunpack.c.h.b16 %v270
    %v649 = vunpack.c.l.b16 %v271
    %v650 = vunpack.c.h.b16 %v271
    %v651 = vunpack.c.l.b16 %v272
    %v652 = vunpack.c.h.b16 %v272
    %v653 = vunpack.c.l.b16 %v273
    %v654 = vunpack.c.h.b16 %v273
    %v655 = vunpack.c.l.b16 %v274
    %v656 = vunpack.c.h.b16 %v274
    %v657 = vunpack.c.l.b16 %v275
    %v658 = vunpack.c.h.b16 %v275
    %v659 = vunpack.c.l.b16 %v276
    %v660 = vunpack.c.h.b16 %v276
    %v661 = vunpack.c.l.b16 %v277
    %v662 = vunpack.c.h.b16 %v277
    %v663 = vunpack.c.l.b16 %v278
    %v664 = vunpack.c.h.b16 %v278
    %v665 = vunpack.c.l.b16 %v279
    %v666 = vunpack.c.h.b16 %v279
    %v667 = vunpack.c.l.b16 %v280
    %v668 = vunpack.c.h.b16 %v280
    %v669 = vunpack.c.l.b16 %v281
    %v670 = vunpack.c.h.b16 %v281
    %v671 = vunpack.c.l.b16 %v282
    %v672 = vunpack.c.h.b16 %v282
    %v673 = vunpack.c.l.b16 %v283
    %v674 = vunpack.c.h.b16 %v283
    %v675 = vunpack.c.l.b16 %v284
    %v676 = vunpack.c.h.b16 %v284
    %v677 = vunpack.c.l.b16 %v285
    %v678 = vunpack.c.h.b16 %v285
    %v679 = vunpack.c.l.b16 %v286
    %v680 = vunpack.c.h.b16 %v286
    %v681 = vunpack.c.l.b16 %v287
    %v682 = vunpack.c.h.b16 %v287
    %v683 = vunpack.c.l.b16 %v288
    %v684 = vunpack.c.h.b16 %v288
    %v685 = vunpack.c.l.b16 %v289
    %v686 = vunpack.c.h.b16 %v289
    %v687 = vunpack.c.l.b16 %v290
    %v688 = vunpack.c.h.b16 %v290
    %v689 = vunpack.c.l.b16 %v291
    %v690 = vunpack.c.h.b16 %v291
    %v691 = vunpack.c.l.b16 %v292
    %v692 = vunpack.c.h.b16 %v292
    %v693 = vunpack.c.l.b16 %v293
    %v694 = vunpack.c.h.b16 %v293
    %v695 = vunpack.c.l.b16 %v294
    %v696 = vunpack.c.h.b16 %v294
    %v697 = vunpack.c.l.b16 %v295
    %v698 = vunpack.c.h.b16 %v295
    %v699 = vunpack.c.l.b16 %v296
    %v700 = vunpack.c.h.b16 %v296
    %v701 = vunpack.c.l.b16 %v297
    %v702 = vunpack.c.h.b16 %v297
    %v703 = vunpack.c.l.b16 %v298
    %v704 = vunpack.c.h.b16 %v298
    %v705 = vunpack.c.l.b16 %v299
    %v706 = vunpack.c.h.b16 %v299
    %v707 = vunpack.c.l.b16 %v300
    %v708 = vunpack.c.h.b16 %v300
    %v709 = vunpack.c.l.b16 %v301
    %v710 = vunpack.c.h.b16 %v301
    %v711 = vunpack.c.l.b16 %v302
    %v712 = vunpack.c.h.b16 %v302
    %v713 = vunpack.c.l.b16 %v303
    %v714 = vunpack.c.h.b16 %v303
    %v715 = vunpack.c.l.b16 %v304
    %v716 = vunpack.c.h.b16 %v304
    %v717 = vunpack.c.l.b16 %v305
    %v718 = vunpack.c.h.b16 %v305
    %v719 = vunpack.c.l.b16 %v306
    %v720 = vunpack.c.h.b16 %v306
    %v721 = vunpack.c.l.b16 %v307
    %v722 = vunpack.c.h.b16 %v307
    %v723 = vunpack.c.l.b16 %v308
    %v724 = vunpack.c.h.b16 %v308
    %v725 = vunpack.c.l.b16 %v309
    %v726 = vunpack.c.h.b16 %v309
    %v727 = vunpack.c.l.b16 %v310
    %v728 = vunpack.c.h.b16 %v310
    %v729 = vunpack.c.l.b16 %v311
    %v730 = vunpack.c.h.b16 %v311
    %v731 = vunpack.c.l.b16 %v312
    %v732 = vunpack.c.h.b16 %v312
    %v733 = vunpack.c.l.b16 %v313
    %v734 = vunpack.c.h.b16 %v313
    %v735 = vunpack.c.l.b16 %v314
    %v736 = vunpack.c.h.b16 %v314
    %v737 = vunpack.c.l.b16 %v315
    %v738 = vunpack.c.h.b16 %v315
    %v739 = vunpack.c.l.b16 %v316
    %v740 = vunpack.c.h.b16 %v316
    %v741 = vunpack.c.l.b16 %v317
    %v742 = vunpack.c.h.b16 %v317
    %v743 = vunpack.c.l.b16 %v318
    %v744 = vunpack.c.h.b16 %v318
    %v745 = vunpack.c.l.b16 %v319
    %v746 = vunpack.c.h.b16 %v319
    %v747 = vunpack.c.l.b16 %v320
    %v748 = vunpack.c.h.b16 %v320
    %v749 = vunpack.c.l.b16 %v321
    %v750 = vunpack.c.h.b16 %v321
    %v751 = vunpack.c.l.b16 %v322
    %v752 = vunpack.c.h.b16 %v322
    %v753 = vunpack.c.l.b16 %v323
    %v754 = vunpack.c.h.b16 %v323
    %v755 = vunpack.c.l.b16 %v324
    %v756 = vunpack.c.h.b16 %v324
    %v757 = vunpack.c.l.b16 %v325
    %v758 = vunpack.c.h.b16 %v325
    %v759 = vunpack.c.l.b16 %v326
    %v760 = vunpack.c.h.b16 %v326
    %v761 = vunpack.c.l.b16 %v327
    %v762 = vunpack.c.h.b16 %v327
    %v763 = vunpack.c.l.b16 %v328
    %v764 = vunpack.c.h.b16 %v328
    %v765 = vunpack.c.l.b16 %v329
    %v766 = vunpack.c.h.b16 %v329
    %v767 = vunpack.c.l.b16 %v330
    %v768 = vunpack.c.h.b16 %v330
    %v769 = vunpack.c.l.b16 %v331
    %v770 = vunpack.c.h.b16 %v331
    %v771 = vunpack.c.l.b16 %v332
    %v772 = vunpack.c.h.b16 %v332
    %v773 = vunpack.c.l.b16 %v333
    %v774 = vunpack.c.h.b16 %v333
    %v775 = vunpack.c.l.b16 %v334
    %v776 = vunpack.c.h.b16 %v334
    %v777 = vunpack.c.l.b16 %v335
    %v778 = vunpack.c.h.b16 %v335
    %v779 = vunpack.c.l.b16 %v336
    %v780 = vunpack.c.h.b16 %v336
    %v781 = vunpack.c.l.b16 %v337
    %v782 = vunpack.c.h.b16 %v337
    %v783 = vunpack.c.l.b16 %v338
    %v784 = vunpack.c.h.b16 %v338
    %v785 = vunpack.c.l.b16 %v339
    %v786 = vunpack.c.h.b16 %v339
    %v787 = vunpack.c.l.b16 %v340
    %v788 = vunpack.c.h.b16 %v340
    %v789 = vunpack.c.l.b16 %v341
    %v790 = vunpack.c.h.b16 %v341
    %v791 = vunpack.c.l.b16 %v342
    %v792 = vunpack.c.h.b16 %v342
    %v793 = vunpack.c.l.b16 %v343
    %v794 = vunpack.c.h.b16 %v343
    %v795 = vunpack.c.l.b16 %v344
    %v796 = vunpack.c.h.b16 %v344
    %v797 = vunpack.c.l.b16 %v345
    %v798 = vunpack.c.h.b16 %v345
    %v799 = vunpack.c.l.b16 %v346
    %v800 = vunpack.c.h.b16 %v346
    %v801 = vunpack.c.l.b16 %v347
    %v802 = vunpack.c.h.b16 %v347
    %v803 = vunpack.c.l.b16 %v348
    %v804 = vunpack.c.h.b16 %v348
    %v805 = vunpack.c.l.b16 %v349
    %v806 = vunpack.c.h.b16 %v349
    %v807 = vunpack.c.l.b16 %v350
    %v808 = vunpack.c.h.b16 %v350
    %v809 = vunpack.c.l.b16 %v351
    %v810 = vunpack.c.h.b16 %v351
    %v811 = vunpack.c.l.b16 %v352
    %v812 = vunpack.c.h.b16 %v352
    %v813 = vunpack.c.l.b16 %v353
    %v814 = vunpack.c.h.b16 %v353
    %v815 = vunpack.c.l.b16 %v354
    %v816 = vunpack.c.h.b16 %v354
    %v817 = vunpack.c.l.b16 %v355
    %v818 = vunpack.c.h.b16 %v355
    %v819 = vunpack.c.l.b16 %v356
    %v820 = vunpack.c.h.b16 %v356
    %v821 = vunpack.c.l.b16 %v357
    %v822 = vunpack.c.h.b16 %v357
    %v823 = vunpack.c.l.b16 %v358
    %v824 = vunpack.c.h.b16 %v358
    %v825 = vunpack.c.l.b16 %v359
    %v826 = vunpack.c.h.b16 %v359
    %v827 = vunpack.c.l.b16 %v360
    %v828 = vunpack.c.h.b16 %v360
    %v829 = vunpack.c.l.b16 %v361
    %v830 = vunpack.c.h.b16 %v361
    %v831 = vunpack.c.l.b16 %v362
    %v832 = vunpack.c.h.b16 %v362
    %v833 = vunpack.c.l.b16 %v363
    %v834 = vunpack.c.h.b16 %v363
    %v835 = vunpack.c.l.b16 %v364
    %v836 = vunpack.c.h.b16 %v364
    %v837 = vunpack.c.l.b16 %v365
    %v838 = vunpack.c.h.b16 %v365
    %v839 = vunpack.c.l.b16 %v366
    %v840 = vunpack.c.h.b16 %v366
    %v841 = vunpack.c.l.b16 %v367
    %v842 = vunpack.c.h.b16 %v367
    %v843 = vunpack.c.l.b16 %v368
    %v844 = vunpack.c.h.b16 %v368
    %v845 = vpack.c.b16 %v591, %v589
    %v846 = vpack.c.b16 %v592, %v590
    %v847 = vpack.c.b16 %v595, %v593
    %v848 = vpack.c.b16 %v596, %v594
    %v849 = vpack.c.b16 %v599, %v597
    %v850 = vpack.c.b16 %v600, %v598
    %v851 = vpack.c.b16 %v603, %v601
    %v852 = vpack.c.b16 %v604, %v602
    %v853 = vpack.c.b16 %v607, %v605
    %v854 = vpack.c.b16 %v608, %v606
    %v855 = vpack.c.b16 %v611, %v609
    %v856 = vpack.c.b16 %v612, %v610
    %v857 = vpack.c.b16 %v615, %v613
    %v858 = vpack.c.b16 %v616, %v614
    %v859 = vpack.c.b16 %v619, %v617
    %v860 = vpack.c.b16 %v620, %v618
    %v861 = vpack.c.b16 %v623, %v621
    %v862 = vpack.c.b16 %v624, %v622
    %v863 = vpack.c.b16 %v627, %v625
    %v864 = vpack.c.b16 %v628, %v626
    %v865 = vpack.c.b16 %v631, %v629
    %v866 = vpack.c.b16 %v632, %v630
    %v867 = vpack.c.b16 %v635, %v633
    %v868 = vpack.c.b16 %v636, %v634
    %v869 = vpack.c.b16 %v639, %v637
    %v870 = vpack.c.b16 %v640, %v638
    %v871 = vpack.c.b16 %v643, %v641
    %v872 = vpack.c.b16 %v644, %v642
    %v873 = vpack.c.b16 %v647, %v645
    %v874 = vpack.c.b16 %v648, %v646
    %v875 = vpack.c.b16 %v651, %v649
    %v876 = vpack.c.b16 %v652, %v650
    %v877 = vpack.c.b16 %v655, %v653
    %v878 = vpack.c.b16 %v656, %v654
    %v879 = vpack.c.b16 %v659, %v657
    %v880 = vpack.c.b16 %v660, %v658
    %v881 = vpack.c.b16 %v663, %v661
    %v882 = vpack.c.b16 %v664, %v662
    %v883 = vpack.c.b16 %v667, %v665
    %v884 = vpack.c.b16 %v668, %v666
    %v885 = vpack.c.b16 %v671, %v669
    %v886 = vpack.c.b16 %v672, %v670
    %v887 = vpack.c.b16 %v675, %v673
    %v888 = vpack.c.b16 %v676, %v674
    %v889 = vpack.c.b16 %v679, %v677
    %v890 = vpack.c.b16 %v680, %v678
    %v891 = vpack.c.b16 %v683, %v681
    %v892 = vpack.c.b16 %v684, %v682
    %v893 = vpack.c.b16 %v687, %v685
    %v894 = vpack.c.b16 %v688, %v686
    %v895 = vpack.c.b16 %v691, %v689
    %v896 = vpack.c.b16 %v692, %v690
    %v897 = vpack.c.b16 %v695, %v693
    %v898 = vpack.c.b16 %v696, %v694
    %v899 = vpack.c.b16 %v699, %v697
    %v900 = vpack.c.b16 %v700, %v698
    %v901 = vpack.c.b16 %v703, %v701
    %v902 = vpack.c.b16 %v704, %v702
    %v903 = vpack.c.b16 %v707, %v705
    %v904 = vpack.c.b16 %v708, %v706
    %v905 = vpack.c.b16 %v711, %v709
    %v906 = vpack.c.b16 %v712, %v710
    %v907 = vpack.c.b16 %v715, %v713
    %v908 = vpack.c.b16 %v716, %v714
    %v909 = vpack.c.b16 %v719, %v717
    %v910 = vpack.c.b16 %v720, %v718
    %v911 = vpack.c.b16 %v723, %v721
    %v912 = vpack.c.b16 %v724, %v722
    %v913 = vpack.c.b16 %v727, %v725
    %v914 = vpack.c.b16 %v728, %v726
    %v915 = vpack.c.b16 %v731, %v729
    %v916 = vpack.c.b16 %v732, %v730
    %v917 = vpack.c.b16 %v735, %v733
    %v918 = vpack.c.b16 %v736, %v734
    %v919 = vpack.c.b16 %v739, %v737
    %v920 = vpack.c.b16 %v740, %v738
    %v921 = vpack.c.b16 %v743, %v741
    %v922 = vpack.c.b16 %v744, %v742
    %v923 = vpack.c.b16 %v747, %v745
    %v924 = vpack.c.b16 %v748, %v746
    %v925 = vpack.c.b16 %v751, %v749
    %v926 = vpack.c.b16 %v752, %v750
    %v927 = vpack.c.b16 %v755, %v753
    %v928 = vpack.c.b16 %v756, %v754
    %v929 = vpack.c.b16 %v759, %v757
    %v930 = vpack.c.b16 %v760, %v758
    %v931 = vpack.c.b16 %v763, %v761
    %v932 = vpack.c.b16 %v764, %v762
    %v933 = vpack.c.b16 %v767, %v765
    %v934 = vpack.c.b16 %v768, %v766
    %v935 = vpack.c.b16 %v771, %v769
    %v936 = vpack.c.b16 %v772, %v770
    %v937 = vpack.c.b16 %v775, %v773
    %v938 = vpack.c.b16 %v776, %v774
    %v939 = vpack.c.b16 %v779, %v777
    %v940 = vpack.c.b16 %v780, %v778
    %v941 = vpack.c.b16 %v783, %v781
    %v942 = vpack.c.b16 %v784, %v782
    %v943 = vpack.c.b16 %v787, %v785
    %v944 = vpack.c.b16 %v788, %v786
    %v945 = vpack.c.b16 %v791, %v789
    %v946 = vpack.c.b16 %v792, %v790
    %v947 = vpack.c.b16 %v795, %v793
    %v948 = vpack.c.b16 %v796, %v794
    %v949 = vpack.c.b16 %v799, %v797
    %v950 = vpack.c.b16 %v800, %v798
    %v951 = vpack.c.b16 %v803, %v801
    %v952 = vpack.c.b16 %v804, %v802
    %v953 = vpack.c.b16 %v807, %v805
    %v954 = vpack.c.b16 %v808, %v806
    %v955 = vpack.c.b16 %v811, %v809
    %v956 = vpack.c.b16 %v812, %v810
    %v957 = vpack.c.b16 %v815, %v813
    %v958 = vpack.c.b16 %v816, %v814
    %v959 = vpack.c.b16 %v819, %v817
    %v960 = vpack.c.b16 %v820, %v818
    %v961 = vpack.c.b16 %v823, %v821
    %v962 = vpack.c.b16 %v824, %v822
    %v963 = vpack.c.b16 %v827, %v825
    %v964 = vpack.c.b16 %v828, %v826
    %v965 = vpack.c.b16 %v831, %v829
    %v966 = vpack.c.b16 %v832, %v830
    %v967 = vpack.c.b16 %v835, %v833
    %v968 = vpack.c.b16 %v836, %v834
    %v969 = vpack.c.b16 %v839, %v837
    %v970 = vpack.c.b16 %v840, %v838
    %v971 = vpack.c.b16 %v843, %v841
    %v972 = vpack.c.b16 %v844, %v842
    %1101 = vmatprep.subr.bf16.mxu0 %v846
    %1102 = vmatpush1.bf16.msra.mxu0 %v845
    %1103 = vmatprep.subr.bf16.mxu0 %v848
    %1104 = vmatpush1.bf16.msra.mxu0 %v847
    %1105 = vmatprep.subr.bf16.mxu0 %v850
    %1106 = vmatpush1.bf16.msra.mxu0 %v849
    %1107 = vmatprep.subr.bf16.mxu0 %v852
    %1108 = vmatpush1.bf16.msra.mxu0 %v851
    %1109 = vmatprep.subr.bf16.mxu0 %v854
    %1110 = vmatpush1.bf16.msra.mxu0 %v853
    %1111 = vmatprep.subr.bf16.mxu0 %v856
    %1112 = vmatpush1.bf16.msra.mxu0 %v855
    %1113 = vmatprep.subr.bf16.mxu0 %v858
    %1114 = vmatpush1.bf16.msra.mxu0 %v857
    %1115 = vmatprep.subr.bf16.mxu0 %v860
    %1116 = vmatpush1.bf16.msra.mxu0 %v859
    %1117 = vmatprep.subr.bf16.mxu0 %v862
    %1118 = vmatpush1.bf16.msra.mxu0 %v861
    %1119 = vmatprep.subr.bf16.mxu0 %v864
    %1120 = vmatpush1.bf16.msra.mxu0 %v863
    %1121 = vmatprep.subr.bf16.mxu0 %v866
    %1122 = vmatpush1.bf16.msra.mxu0 %v865
    %1123 = vmatprep.subr.bf16.mxu0 %v868
    %1124 = vmatpush1.bf16.msra.mxu0 %v867
    %1125 = vmatprep.subr.bf16.mxu0 %v870
    %1126 = vmatpush1.bf16.msra.mxu0 %v869
    %1127 = vmatprep.subr.bf16.mxu0 %v872
    %1128 = vmatpush1.bf16.msra.mxu0 %v871
    %1129 = vmatprep.subr.bf16.mxu0 %v874
    %1130 = vmatpush1.bf16.msra.mxu0 %v873
    %1131 = vmatprep.subr.bf16.mxu0 %v876
    %1132 = vmatpush1.bf16.msra.mxu0 %v875
    %1133 = vmatprep.mubr.bf16.mxu0 %v441
    %1134 = vmatmul.mubr.bf16.gmra.mrb[0].mxu0 %v427
    %v1135 = vpop.f32.mrb[0].mxu0
    %v1136 = vadd.f32 %v374, %v1135
    %v1137 = vpop.f32.mrb[0].mxu0
    %v1138 = vadd.f32 %v378, %v1137
    %v1139 = vpop.f32.mrb[0].mxu0
    %v1140 = vpop.f32.mrb[0].mxu0
    %1141 = vdwg.mxu0
    %1142 = vmatprep.subr.bf16.mxu0 %v878
    %1143 = vmatpush1.bf16.msra.mxu0 %v877
    %1144 = vmatprep.subr.bf16.mxu0 %v880
    %1145 = vmatpush1.bf16.msra.mxu0 %v879
    %1146 = vmatprep.subr.bf16.mxu0 %v882
    %1147 = vmatpush1.bf16.msra.mxu0 %v881
    %1148 = vmatprep.subr.bf16.mxu0 %v884
    %1149 = vmatpush1.bf16.msra.mxu0 %v883
    %1150 = vmatprep.subr.bf16.mxu0 %v886
    %1151 = vmatpush1.bf16.msra.mxu0 %v885
    %1152 = vmatprep.subr.bf16.mxu0 %v888
    %1153 = vmatpush1.bf16.msra.mxu0 %v887
    %1154 = vmatprep.subr.bf16.mxu0 %v890
    %1155 = vmatpush1.bf16.msra.mxu0 %v889
    %1156 = vmatprep.subr.bf16.mxu0 %v892
    %1157 = vmatpush1.bf16.msra.mxu0 %v891
    %1158 = vmatprep.subr.bf16.mxu0 %v894
    %1159 = vmatpush1.bf16.msra.mxu0 %v893
    %1160 = vmatprep.subr.bf16.mxu0 %v896
    %1161 = vmatpush1.bf16.msra.mxu0 %v895
    %1162 = vmatprep.subr.bf16.mxu0 %v898
    %1163 = vmatpush1.bf16.msra.mxu0 %v897
    %1164 = vmatprep.subr.bf16.mxu0 %v900
    %1165 = vmatpush1.bf16.msra.mxu0 %v899
    %1166 = vmatprep.subr.bf16.mxu0 %v902
    %1167 = vmatpush1.bf16.msra.mxu0 %v901
    %1168 = vmatprep.subr.bf16.mxu0 %v904
    %1169 = vmatpush1.bf16.msra.mxu0 %v903
    %1170 = vmatprep.subr.bf16.mxu0 %v906
    %1171 = vmatpush1.bf16.msra.mxu0 %v905
    %1172 = vmatprep.subr.bf16.mxu0 %v908
    %1173 = vmatpush1.bf16.msra.mxu0 %v907
    %1174 = vmatprep.mubr.bf16.mxu0 %v451
    %1175 = vmatmul.mubr.bf16.gmra.mrb[0].mxu0 %v449
    %v1176 = vpop.f32.mrb[0].mxu0
    %v1177 = vadd.f32 %v1136, %v1176
    %v1178 = vpop.f32.mrb[0].mxu0
    %v1179 = vadd.f32 %v1138, %v1178
    %v1180 = vpop.f32.mrb[0].mxu0
    %v1181 = vpop.f32.mrb[0].mxu0
    %1182 = vdwg.mxu0
    %1183 = vmatprep.subr.bf16.mxu0 %v910
    %1184 = vmatpush1.bf16.msra.mxu0 %v909
    %1185 = vmatprep.subr.bf16.mxu0 %v912
    %1186 = vmatpush1.bf16.msra.mxu0 %v911
    %1187 = vmatprep.subr.bf16.mxu0 %v914
    %1188 = vmatpush1.bf16.msra.mxu0 %v913
    %1189 = vmatprep.subr.bf16.mxu0 %v916
    %1190 = vmatpush1.bf16.msra.mxu0 %v915
    %1191 = vmatprep.subr.bf16.mxu0 %v918
    %1192 = vmatpush1.bf16.msra.mxu0 %v917
    %1193 = vmatprep.subr.bf16.mxu0 %v920
    %1194 = vmatpush1.bf16.msra.mxu0 %v919
    %1195 = vmatprep.subr.bf16.mxu0 %v922
    %1196 = vmatpush1.bf16.msra.mxu0 %v921
    %1197 = vmatprep.subr.bf16.mxu0 %v924
    %1198 = vmatpush1.bf16.msra.mxu0 %v923
    %1199 = vmatprep.subr.bf16.mxu0 %v926
    %1200 = vmatpush1.bf16.msra.mxu0 %v925
    %1201 = vmatprep.subr.bf16.mxu0 %v928
    %1202 = vmatpush1.bf16.msra.mxu0 %v927
    %1203 = vmatprep.subr.bf16.mxu0 %v930
    %1204 = vmatpush1.bf16.msra.mxu0 %v929
    %1205 = vmatprep.subr.bf16.mxu0 %v932
    %1206 = vmatpush1.bf16.msra.mxu0 %v931
    %1207 = vmatprep.subr.bf16.mxu0 %v934
    %1208 = vmatpush1.bf16.msra.mxu0 %v933
    %1209 = vmatprep.subr.bf16.mxu0 %v936
    %1210 = vmatpush1.bf16.msra.mxu0 %v935
    %1211 = vmatprep.subr.bf16.mxu0 %v938
    %1212 = vmatpush1.bf16.msra.mxu0 %v937
    %1213 = vmatprep.subr.bf16.mxu0 %v940
    %1214 = vmatpush1.bf16.msra.mxu0 %v939
    %1215 = vmatprep.mubr.bf16.mxu0 %v448
    %1216 = vmatmul.mubr.bf16.gmra.mrb[0].mxu0 %v434
    %v1217 = vpop.f32.mrb[0].mxu0
    %v1218 = vadd.f32 %v1177, %v1217
    %v1219 = vpop.f32.mrb[0].mxu0
    %v1220 = vadd.f32 %v1179, %v1219
    %v1221 = vpop.f32.mrb[0].mxu0
    %v1222 = vpop.f32.mrb[0].mxu0
    %1223 = vdwg.mxu0
    %1224 = vmatprep.subr.bf16.mxu0 %v942
    %1225 = vmatpush1.bf16.msra.mxu0 %v941
    %1226 = vmatprep.subr.bf16.mxu0 %v944
    %1227 = vmatpush1.bf16.msra.mxu0 %v943
    %1228 = vmatprep.subr.bf16.mxu0 %v946
    %1229 = vmatpush1.bf16.msra.mxu0 %v945
    %1230 = vmatprep.subr.bf16.mxu0 %v948
    %1231 = vmatpush1.bf16.msra.mxu0 %v947
    %1232 = vmatprep.subr.bf16.mxu0 %v950
    %1233 = vmatpush1.bf16.msra.mxu0 %v949
    %1234 = vmatprep.subr.bf16.mxu0 %v952
    %1235 = vmatpush1.bf16.msra.mxu0 %v951
    %1236 = vmatprep.subr.bf16.mxu0 %v954
    %1237 = vmatpush1.bf16.msra.mxu0 %v953
    %1238 = vmatprep.subr.bf16.mxu0 %v956
    %1239 = vmatpush1.bf16.msra.mxu0 %v955
    %1240 = vmatprep.subr.bf16.mxu0 %v958
    %1241 = vmatpush1.bf16.msra.mxu0 %v957
    %1242 = vmatprep.subr.bf16.mxu0 %v960
    %1243 = vmatpush1.bf16.msra.mxu0 %v959
    %1244 = vmatprep.subr.bf16.mxu0 %v962
    %1245 = vmatpush1.bf16.msra.mxu0 %v961
    %1246 = vmatprep.subr.bf16.mxu0 %v964
    %1247 = vmatpush1.bf16.msra.mxu0 %v963
    %1248 = vmatprep.subr.bf16.mxu0 %v966
    %1249 = vmatpush1.bf16.msra.mxu0 %v965
    %1250 = vmatprep.subr.bf16.mxu0 %v968
    %1251 = vmatpush1.bf16.msra.mxu0 %v967
    %1252 = vmatprep.subr.bf16.mxu0 %v970
    %1253 = vmatpush1.bf16.msra.mxu0 %v969
    %1254 = vmatprep.subr.bf16.mxu0 %v972
    %1255 = vmatpush1.bf16.msra.mxu0 %v971
    %1256 = vmatprep.mubr.bf16.mxu0 %v452
    %1257 = vmatmul.mubr.bf16.gmra.mrb[0].mxu0 %v450
    %v1258 = vpop.f32.mrb[0].mxu0
    %v1259 = vadd.f32 %v1218, %v1258
    %v1260 = vpop.f32.mrb[0].mxu0
    %v1261 = vadd.f32 %v1220, %v1260
    %v1262 = vpop.f32.mrb[0].mxu0
    %v1263 = vpop.f32.mrb[0].mxu0
    %1264 = vdwg.mxu0
    %v1265 = vmax.f32 %v1259, 0.0
    %v1266 = vmax.f32 %v1261, 0.0
    %v1267 = vpack.c.bf16 %v1265, %v1265
    %v1268 = vpack.c.bf16 %v1266, %v1266
    %v1269 = vld [vmem:[#allocation8] sm:$0xff]
    %v1270 = vld [vmem:[#allocation8 + $0x8] sm:$0xff]
    %v1271 = vld [vmem:[#allocation8 + $0x10] sm:$0xff]
    %v1272 = vld [vmem:[#allocation8 + $0x18] sm:$0xff]
    %v1273 = vld [vmem:[#allocation8 + $0x20] sm:$0xff]
    %v1274 = vld [vmem:[#allocation8 + $0x28] sm:$0xff]
    %v1275 = vld [vmem:[#allocation8 + $0x30] sm:$0xff]
    %v1276 = vld [vmem:[#allocation8 + $0x38] sm:$0xff]
    %v1277 = vld [vmem:[#allocation8 + $0x40] sm:$0xff]
    %v1278 = vld [vmem:[#allocation8 + $0x48] sm:$0xff]
    %v1279 = vld [vmem:[#allocation8 + $0x50] sm:$0xff]
    %v1280 = vld [vmem:[#allocation8 + $0x58] sm:$0xff]
    %v1281 = vld [vmem:[#allocation8 + $0x60] sm:$0xff]
    %v1282 = vld [vmem:[#allocation8 + $0x68] sm:$0xff]
    %v1283 = vld [vmem:[#allocation8 + $0x70] sm:$0xff]
    %v1284 = vld [vmem:[#allocation8 + $0x78] sm:$0xff]
    %v1285 = vld [vmem:[#allocation8 + $0x80] sm:$0xff]
    %v1286 = vld [vmem:[#allocation8 + $0x88] sm:$0xff]
    %v1287 = vld [vmem:[#allocation8 + $0x90] sm:$0xff]
    %v1288 = vld [vmem:[#allocation8 + $0x98] sm:$0xff]
    %v1289 = vld [vmem:[#allocation8 + $0xa0] sm:$0xff]
    %v1290 = vld [vmem:[#allocation8 + $0xa8] sm:$0xff]
    %v1291 = vld [vmem:[#allocation8 + $0xb0] sm:$0xff]
    %v1292 = vld [vmem:[#allocation8 + $0xb8] sm:$0xff]
    %v1293 = vld [vmem:[#allocation8 + $0xc0] sm:$0xff]
    %v1294 = vld [vmem:[#allocation8 + $0xc8] sm:$0xff]
    %v1295 = vld [vmem:[#allocation8 + $0xd0] sm:$0xff]
    %v1296 = vld [vmem:[#allocation8 + $0xd8] sm:$0xff]
    %v1297 = vld [vmem:[#allocation8 + $0xe0] sm:$0xff]
    %v1298 = vld [vmem:[#allocation8 + $0xe8] sm:$0xff]
    %v1299 = vld [vmem:[#allocation8 + $0xf0] sm:$0xff]
    %v1300 = vld [vmem:[#allocation8 + $0xf8] sm:$0xff]
    %v1301 = vld [vmem:[#allocation10] sm:$0x3]
    %v1303 = vlaneseq
    %v1304 = vshrl.u32 %v1303, 7
    %v1305 = vsub.s32 0, %v1304
    %v1306 = vrot.slane %v1301, %v1305
    %v1307 = vlaneseq
    %v1308 = vshrl.u32 %v1307, 7
    %v1309 = vsub.s32 1, %v1308
    %v1310 = vrot.slane %v1301, %v1309
    %v1345 = vunpack.c.l.b16 %v1269
    %v1346 = vunpack.c.h.b16 %v1269
    %v1347 = vunpack.c.l.b16 %v1270
    %v1348 = vunpack.c.h.b16 %v1270
    %v1349 = vunpack.c.l.b16 %v1271
    %v1350 = vunpack.c.h.b16 %v1271
    %v1351 = vunpack.c.l.b16 %v1272
    %v1352 = vunpack.c.h.b16 %v1272
    %v1353 = vunpack.c.l.b16 %v1273
    %v1354 = vunpack.c.h.b16 %v1273
    %v1355 = vunpack.c.l.b16 %v1274
    %v1356 = vunpack.c.h.b16 %v1274
    %v1357 = vunpack.c.l.b16 %v1275
    %v1358 = vunpack.c.h.b16 %v1275
    %v1359 = vunpack.c.l.b16 %v1276
    %v1360 = vunpack.c.h.b16 %v1276
    %v1361 = vunpack.c.l.b16 %v1277
    %v1362 = vunpack.c.h.b16 %v1277
    %v1363 = vunpack.c.l.b16 %v1278
    %v1364 = vunpack.c.h.b16 %v1278
    %v1365 = vunpack.c.l.b16 %v1279
    %v1366 = vunpack.c.h.b16 %v1279
    %v1367 = vunpack.c.l.b16 %v1280
    %v1368 = vunpack.c.h.b16 %v1280
    %v1369 = vunpack.c.l.b16 %v1281
    %v1370 = vunpack.c.h.b16 %v1281
    %v1371 = vunpack.c.l.b16 %v1282
    %v1372 = vunpack.c.h.b16 %v1282
    %v1373 = vunpack.c.l.b16 %v1283
    %v1374 = vunpack.c.h.b16 %v1283
    %v1375 = vunpack.c.l.b16 %v1284
    %v1376 = vunpack.c.h.b16 %v1284
    %v1377 = vunpack.c.l.b16 %v1285
    %v1378 = vunpack.c.h.b16 %v1285
    %v1379 = vunpack.c.l.b16 %v1286
    %v1380 = vunpack.c.h.b16 %v1286
    %v1381 = vunpack.c.l.b16 %v1287
    %v1382 = vunpack.c.h.b16 %v1287
    %v1383 = vunpack.c.l.b16 %v1288
    %v1384 = vunpack.c.h.b16 %v1288
    %v1385 = vunpack.c.l.b16 %v1289
    %v1386 = vunpack.c.h.b16 %v1289
    %v1387 = vunpack.c.l.b16 %v1290
    %v1388 = vunpack.c.h.b16 %v1290
    %v1389 = vunpack.c.l.b16 %v1291
    %v1390 = vunpack.c.h.b16 %v1291
    %v1391 = vunpack.c.l.b16 %v1292
    %v1392 = vunpack.c.h.b16 %v1292
    %v1393 = vunpack.c.l.b16 %v1293
    %v1394 = vunpack.c.h.b16 %v1293
    %v1395 = vunpack.c.l.b16 %v1294
    %v1396 = vunpack.c.h.b16 %v1294
    %v1397 = vunpack.c.l.b16 %v1295
    %v1398 = vunpack.c.h.b16 %v1295
    %v1399 = vunpack.c.l.b16 %v1296
    %v1400 = vunpack.c.h.b16 %v1296
    %v1401 = vunpack.c.l.b16 %v1297
    %v1402 = vunpack.c.h.b16 %v1297
    %v1403 = vunpack.c.l.b16 %v1298
    %v1404 = vunpack.c.h.b16 %v1298
    %v1405 = vunpack.c.l.b16 %v1299
    %v1406 = vunpack.c.h.b16 %v1299
    %v1407 = vunpack.c.l.b16 %v1300
    %v1408 = vunpack.c.h.b16 %v1300
    %v1409 = vpack.c.b16 %v1347, %v1345
    %v1410 = vpack.c.b16 %v1348, %v1346
    %v1411 = vpack.c.b16 %v1351, %v1349
    %v1412 = vpack.c.b16 %v1352, %v1350
    %v1413 = vpack.c.b16 %v1355, %v1353
    %v1414 = vpack.c.b16 %v1356, %v1354
    %v1415 = vpack.c.b16 %v1359, %v1357
    %v1416 = vpack.c.b16 %v1360, %v1358
    %v1417 = vpack.c.b16 %v1363, %v1361
    %v1418 = vpack.c.b16 %v1364, %v1362
    %v1419 = vpack.c.b16 %v1367, %v1365
    %v1420 = vpack.c.b16 %v1368, %v1366
    %v1421 = vpack.c.b16 %v1371, %v1369
    %v1422 = vpack.c.b16 %v1372, %v1370
    %v1423 = vpack.c.b16 %v1375, %v1373
    %v1424 = vpack.c.b16 %v1376, %v1374
    %v1425 = vpack.c.b16 %v1379, %v1377
    %v1426 = vpack.c.b16 %v1380, %v1378
    %v1427 = vpack.c.b16 %v1383, %v1381
    %v1428 = vpack.c.b16 %v1384, %v1382
    %v1429 = vpack.c.b16 %v1387, %v1385
    %v1430 = vpack.c.b16 %v1388, %v1386
    %v1431 = vpack.c.b16 %v1391, %v1389
    %v1432 = vpack.c.b16 %v1392, %v1390
    %v1433 = vpack.c.b16 %v1395, %v1393
    %v1434 = vpack.c.b16 %v1396, %v1394
    %v1435 = vpack.c.b16 %v1399, %v1397
    %v1436 = vpack.c.b16 %v1400, %v1398
    %v1437 = vpack.c.b16 %v1403, %v1401
    %v1438 = vpack.c.b16 %v1404, %v1402
    %v1439 = vpack.c.b16 %v1407, %v1405
    %v1440 = vpack.c.b16 %v1408, %v1406
    %1473 = vmatprep.subr.bf16.mxu0 %v1410
    %1474 = vmatpush1.bf16.msra.mxu0 %v1409
    %1475 = vmatprep.subr.bf16.mxu0 %v1412
    %1476 = vmatpush1.bf16.msra.mxu0 %v1411
    %1477 = vmatprep.subr.bf16.mxu0 %v1414
    %1478 = vmatpush1.bf16.msra.mxu0 %v1413
    %1479 = vmatprep.subr.bf16.mxu0 %v1416
    %1480 = vmatpush1.bf16.msra.mxu0 %v1415
    %1481 = vmatprep.subr.bf16.mxu0 %v1418
    %1482 = vmatpush1.bf16.msra.mxu0 %v1417
    %1483 = vmatprep.subr.bf16.mxu0 %v1420
    %1484 = vmatpush1.bf16.msra.mxu0 %v1419
    %1485 = vmatprep.subr.bf16.mxu0 %v1422
    %1486 = vmatpush1.bf16.msra.mxu0 %v1421
    %1487 = vmatprep.subr.bf16.mxu0 %v1424
    %1488 = vmatpush1.bf16.msra.mxu0 %v1423
    %1489 = vmatprep.subr.bf16.mxu0 %v1426
    %1490 = vmatpush1.bf16.msra.mxu0 %v1425
    %1491 = vmatprep.subr.bf16.mxu0 %v1428
    %1492 = vmatpush1.bf16.msra.mxu0 %v1427
    %1493 = vmatprep.subr.bf16.mxu0 %v1430
    %1494 = vmatpush1.bf16.msra.mxu0 %v1429
    %1495 = vmatprep.subr.bf16.mxu0 %v1432
    %1496 = vmatpush1.bf16.msra.mxu0 %v1431
    %1497 = vmatprep.subr.bf16.mxu0 %v1434
    %1498 = vmatpush1.bf16.msra.mxu0 %v1433
    %1499 = vmatprep.subr.bf16.mxu0 %v1436
    %1500 = vmatpush1.bf16.msra.mxu0 %v1435
    %1501 = vmatprep.subr.bf16.mxu0 %v1438
    %1502 = vmatpush1.bf16.msra.mxu0 %v1437
    %1503 = vmatprep.subr.bf16.mxu0 %v1440
    %1504 = vmatpush1.bf16.msra.mxu0 %v1439
    %1505 = vmatprep.mubr.bf16.mxu0 %v1268
    %1506 = vmatmul.mubr.bf16.gmra.mrb[0].mxu0 %v1267
    %v1507 = vpop.f32.mrb[0].mxu0
    %v1508 = vadd.f32 %v1306, %v1507
    %v1509 = vpop.f32.mrb[0].mxu0
    %v1510 = vadd.f32 %v1310, %v1509
    %v1511 = vpop.f32.mrb[0].mxu0
    %v1512 = vpop.f32.mrb[0].mxu0
    %1513 = vdwg.mxu0
    %v1514 = vmax.f32 %v1508, 0.0
    %v1515 = vmax.f32 %v1510, 0.0
    %v1516 = vpack.c.bf16 %v1514, %v1514
    %v1517 = vpack.c.bf16 %v1515, %v1515
    %v1518 = vld [vmem:[#allocation11] sm:$0xff]
    %v1519 = vld [vmem:[#allocation11 + $0x8] sm:$0xff]
    %v1520 = vld [vmem:[#allocation11 + $0x10] sm:$0xff]
    %v1521 = vld [vmem:[#allocation11 + $0x18] sm:$0xff]
    %v1522 = vld [vmem:[#allocation11 + $0x20] sm:$0xff]
    %v1523 = vld [vmem:[#allocation11 + $0x28] sm:$0xff]
    %v1524 = vld [vmem:[#allocation11 + $0x30] sm:$0xff]
    %v1525 = vld [vmem:[#allocation11 + $0x38] sm:$0xff]
    %v1526 = vld [vmem:[#allocation11 + $0x40] sm:$0xff]
    %v1527 = vld [vmem:[#allocation11 + $0x48] sm:$0xff]
    %v1528 = vld [vmem:[#allocation11 + $0x50] sm:$0xff]
    %v1529 = vld [vmem:[#allocation11 + $0x58] sm:$0xff]
    %v1530 = vld [vmem:[#allocation11 + $0x60] sm:$0xff]
    %v1531 = vld [vmem:[#allocation11 + $0x68] sm:$0xff]
    %v1532 = vld [vmem:[#allocation11 + $0x70] sm:$0xff]
    %v1533 = vld [vmem:[#allocation11 + $0x78] sm:$0xff]
    %v1534 = vld [vmem:[#allocation11 + $0x80] sm:$0xff]
    %v1535 = vld [vmem:[#allocation11 + $0x88] sm:$0xff]
    %v1536 = vld [vmem:[#allocation11 + $0x90] sm:$0xff]
    %v1537 = vld [vmem:[#allocation11 + $0x98] sm:$0xff]
    %v1538 = vld [vmem:[#allocation11 + $0xa0] sm:$0xff]
    %v1539 = vld [vmem:[#allocation11 + $0xa8] sm:$0xff]
    %v1540 = vld [vmem:[#allocation11 + $0xb0] sm:$0xff]
    %v1541 = vld [vmem:[#allocation11 + $0xb8] sm:$0xff]
    %v1542 = vld [vmem:[#allocation11 + $0xc0] sm:$0xff]
    %v1543 = vld [vmem:[#allocation11 + $0xc8] sm:$0xff]
    %v1544 = vld [vmem:[#allocation11 + $0xd0] sm:$0xff]
    %v1545 = vld [vmem:[#allocation11 + $0xd8] sm:$0xff]
    %v1546 = vld [vmem:[#allocation11 + $0xe0] sm:$0xff]
    %v1547 = vld [vmem:[#allocation11 + $0xe8] sm:$0xff]
    %v1548 = vld [vmem:[#allocation11 + $0xf0] sm:$0xff]
    %v1549 = vld [vmem:[#allocation11 + $0xf8] sm:$0xff]
    %v1550 = vld [vmem:[#allocation13] sm:$0x3]
    %v1552 = vlaneseq
    %v1553 = vshrl.u32 %v1552, 7
    %v1554 = vsub.s32 0, %v1553
    %v1555 = vrot.slane %v1550, %v1554
    %v1556 = vlaneseq
    %v1557 = vshrl.u32 %v1556, 7
    %v1558 = vsub.s32 1, %v1557
    %v1559 = vrot.slane %v1550, %v1558
    %v1594 = vunpack.c.l.b16 %v1518
    %v1595 = vunpack.c.h.b16 %v1518
    %v1596 = vunpack.c.l.b16 %v1519
    %v1597 = vunpack.c.h.b16 %v1519
    %v1598 = vunpack.c.l.b16 %v1520
    %v1599 = vunpack.c.h.b16 %v1520
    %v1600 = vunpack.c.l.b16 %v1521
    %v1601 = vunpack.c.h.b16 %v1521
    %v1602 = vunpack.c.l.b16 %v1522
    %v1603 = vunpack.c.h.b16 %v1522
    %v1604 = vunpack.c.l.b16 %v1523
    %v1605 = vunpack.c.h.b16 %v1523
    %v1606 = vunpack.c.l.b16 %v1524
    %v1607 = vunpack.c.h.b16 %v1524
    %v1608 = vunpack.c.l.b16 %v1525
    %v1609 = vunpack.c.h.b16 %v1525
    %v1610 = vunpack.c.l.b16 %v1526
    %v1611 = vunpack.c.h.b16 %v1526
    %v1612 = vunpack.c.l.b16 %v1527
    %v1613 = vunpack.c.h.b16 %v1527
    %v1614 = vunpack.c.l.b16 %v1528
    %v1615 = vunpack.c.h.b16 %v1528
    %v1616 = vunpack.c.l.b16 %v1529
    %v1617 = vunpack.c.h.b16 %v1529
    %v1618 = vunpack.c.l.b16 %v1530
    %v1619 = vunpack.c.h.b16 %v1530
    %v1620 = vunpack.c.l.b16 %v1531
    %v1621 = vunpack.c.h.b16 %v1531
    %v1622 = vunpack.c.l.b16 %v1532
    %v1623 = vunpack.c.h.b16 %v1532
    %v1624 = vunpack.c.l.b16 %v1533
    %v1625 = vunpack.c.h.b16 %v1533
    %v1626 = vunpack.c.l.b16 %v1534
    %v1627 = vunpack.c.h.b16 %v1534
    %v1628 = vunpack.c.l.b16 %v1535
    %v1629 = vunpack.c.h.b16 %v1535
    %v1630 = vunpack.c.l.b16 %v1536
    %v1631 = vunpack.c.h.b16 %v1536
    %v1632 = vunpack.c.l.b16 %v1537
    %v1633 = vunpack.c.h.b16 %v1537
    %v1634 = vunpack.c.l.b16 %v1538
    %v1635 = vunpack.c.h.b16 %v1538
    %v1636 = vunpack.c.l.b16 %v1539
    %v1637 = vunpack.c.h.b16 %v1539
    %v1638 = vunpack.c.l.b16 %v1540
    %v1639 = vunpack.c.h.b16 %v1540
    %v1640 = vunpack.c.l.b16 %v1541
    %v1641 = vunpack.c.h.b16 %v1541
    %v1642 = vunpack.c.l.b16 %v1542
    %v1643 = vunpack.c.h.b16 %v1542
    %v1644 = vunpack.c.l.b16 %v1543
    %v1645 = vunpack.c.h.b16 %v1543
    %v1646 = vunpack.c.l.b16 %v1544
    %v1647 = vunpack.c.h.b16 %v1544
    %v1648 = vunpack.c.l.b16 %v1545
    %v1649 = vunpack.c.h.b16 %v1545
    %v1650 = vunpack.c.l.b16 %v1546
    %v1651 = vunpack.c.h.b16 %v1546
    %v1652 = vunpack.c.l.b16 %v1547
    %v1653 = vunpack.c.h.b16 %v1547
    %v1654 = vunpack.c.l.b16 %v1548
    %v1655 = vunpack.c.h.b16 %v1548
    %v1656 = vunpack.c.l.b16 %v1549
    %v1657 = vunpack.c.h.b16 %v1549
    %v1658 = vpack.c.b16 %v1596, %v1594
    %v1659 = vpack.c.b16 %v1597, %v1595
    %v1660 = vpack.c.b16 %v1600, %v1598
    %v1661 = vpack.c.b16 %v1601, %v1599
    %v1662 = vpack.c.b16 %v1604, %v1602
    %v1663 = vpack.c.b16 %v1605, %v1603
    %v1664 = vpack.c.b16 %v1608, %v1606
    %v1665 = vpack.c.b16 %v1609, %v1607
    %v1666 = vpack.c.b16 %v1612, %v1610
    %v1667 = vpack.c.b16 %v1613, %v1611
    %v1668 = vpack.c.b16 %v1616, %v1614
    %v1669 = vpack.c.b16 %v1617, %v1615
    %v1670 = vpack.c.b16 %v1620, %v1618
    %v1671 = vpack.c.b16 %v1621, %v1619
    %v1672 = vpack.c.b16 %v1624, %v1622
    %v1673 = vpack.c.b16 %v1625, %v1623
    %v1674 = vpack.c.b16 %v1628, %v1626
    %v1675 = vpack.c.b16 %v1629, %v1627
    %v1676 = vpack.c.b16 %v1632, %v1630
    %v1677 = vpack.c.b16 %v1633, %v1631
    %v1678 = vpack.c.b16 %v1636, %v1634
    %v1679 = vpack.c.b16 %v1637, %v1635
    %v1680 = vpack.c.b16 %v1640, %v1638
    %v1681 = vpack.c.b16 %v1641, %v1639
    %v1682 = vpack.c.b16 %v1644, %v1642
    %v1683 = vpack.c.b16 %v1645, %v1643
    %v1684 = vpack.c.b16 %v1648, %v1646
    %v1685 = vpack.c.b16 %v1649, %v1647
    %v1686 = vpack.c.b16 %v1652, %v1650
    %v1687 = vpack.c.b16 %v1653, %v1651
    %v1688 = vpack.c.b16 %v1656, %v1654
    %v1689 = vpack.c.b16 %v1657, %v1655
    %1722 = vmatprep.subr.bf16.mxu0 %v1659
    %1723 = vmatpush1.bf16.msra.mxu0 %v1658
    %1724 = vmatprep.subr.bf16.mxu0 %v1661
    %1725 = vmatpush1.bf16.msra.mxu0 %v1660
    %1726 = vmatprep.subr.bf16.mxu0 %v1663
    %1727 = vmatpush1.bf16.msra.mxu0 %v1662
    %1728 = vmatprep.subr.bf16.mxu0 %v1665
    %1729 = vmatpush1.bf16.msra.mxu0 %v1664
    %1730 = vmatprep.subr.bf16.mxu0 %v1667
    %1731 = vmatpush1.bf16.msra.mxu0 %v1666
    %1732 = vmatprep.subr.bf16.mxu0 %v1669
    %1733 = vmatpush1.bf16.msra.mxu0 %v1668
    %1734 = vmatprep.subr.bf16.mxu0 %v1671
    %1735 = vmatpush1.bf16.msra.mxu0 %v1670
    %1736 = vmatprep.subr.bf16.mxu0 %v1673
    %1737 = vmatpush1.bf16.msra.mxu0 %v1672
    %1738 = vmatprep.subr.bf16.mxu0 %v1675
    %1739 = vmatpush1.bf16.msra.mxu0 %v1674
    %1740 = vmatprep.subr.bf16.mxu0 %v1677
    %1741 = vmatpush1.bf16.msra.mxu0 %v1676
    %1742 = vmatprep.subr.bf16.mxu0 %v1679
    %1743 = vmatpush1.bf16.msra.mxu0 %v1678
    %1744 = vmatprep.subr.bf16.mxu0 %v1681
    %1745 = vmatpush1.bf16.msra.mxu0 %v1680
    %1746 = vmatprep.subr.bf16.mxu0 %v1683
    %1747 = vmatpush1.bf16.msra.mxu0 %v1682
    %1748 = vmatprep.subr.bf16.mxu0 %v1685
    %1749 = vmatpush1.bf16.msra.mxu0 %v1684
    %1750 = vmatprep.subr.bf16.mxu0 %v1687
    %1751 = vmatpush1.bf16.msra.mxu0 %v1686
    %1752 = vmatprep.subr.bf16.mxu0 %v1689
    %1753 = vmatpush1.bf16.msra.mxu0 %v1688
    %1754 = vmatprep.mubr.bf16.mxu0 %v1517
    %1755 = vmatmul.mubr.bf16.gmra.mrb[0].mxu0 %v1516
    %v1756 = vpop.f32.mrb[0].mxu0
    %v1757 = vadd.f32 %v1555, %v1756
    %v1758 = vpop.f32.mrb[0].mxu0
    %v1759 = vadd.f32 %v1559, %v1758
    %v1760 = vpop.f32.mrb[0].mxu0
    %v1761 = vpop.f32.mrb[0].mxu0
    %1762 = vdwg.mxu0
    %v1763 = vmax.f32 %v1757, 0.0
    %v1764 = vmax.f32 %v1759, 0.0
    %v1765 = vpack.c.bf16 %v1763, %v1763
    %v1766 = vpack.c.bf16 %v1764, %v1764
    %v1767 = vld [vmem:[#allocation14] sm:$0xf]
    %v1768 = vld [vmem:[#allocation14 + $0x4] sm:$0xf]
    %v1769 = vld [vmem:[#allocation14 + $0x8] sm:$0xf]
    %v1770 = vld [vmem:[#allocation14 + $0xc] sm:$0xf]
    %v1771 = vld [vmem:[#allocation14 + $0x10] sm:$0xf]
    %v1772 = vld [vmem:[#allocation14 + $0x14] sm:$0xf]
    %v1773 = vld [vmem:[#allocation14 + $0x18] sm:$0xf]
    %v1774 = vld [vmem:[#allocation14 + $0x1c] sm:$0xf]
    %v1775 = vld [vmem:[#allocation14 + $0x20] sm:$0xf]
    %v1776 = vld [vmem:[#allocation14 + $0x24] sm:$0xf]
    %v1777 = vld [vmem:[#allocation14 + $0x28] sm:$0xf]
    %v1778 = vld [vmem:[#allocation14 + $0x2c] sm:$0xf]
    %v1779 = vld [vmem:[#allocation14 + $0x30] sm:$0xf]
    %v1780 = vld [vmem:[#allocation14 + $0x34] sm:$0xf]
    %v1781 = vld [vmem:[#allocation14 + $0x38] sm:$0xf]
    %v1782 = vld [vmem:[#allocation14 + $0x3c] sm:$0xf]
    %v1783 = vld [vmem:[#allocation14 + $0x40] sm:$0xf]
    %v1784 = vld [vmem:[#allocation14 + $0x44] sm:$0xf]
    %v1785 = vld [vmem:[#allocation14 + $0x48] sm:$0xf]
    %v1786 = vld [vmem:[#allocation14 + $0x4c] sm:$0xf]
    %v1787 = vld [vmem:[#allocation14 + $0x50] sm:$0xf]
    %v1788 = vld [vmem:[#allocation14 + $0x54] sm:$0xf]
    %v1789 = vld [vmem:[#allocation14 + $0x58] sm:$0xf]
    %v1790 = vld [vmem:[#allocation14 + $0x5c] sm:$0xf]
    %v1791 = vld [vmem:[#allocation14 + $0x60] sm:$0xf]
    %v1792 = vld [vmem:[#allocation14 + $0x64] sm:$0xf]
    %v1793 = vld [vmem:[#allocation14 + $0x68] sm:$0xf]
    %v1794 = vld [vmem:[#allocation14 + $0x6c] sm:$0xf]
    %v1795 = vld [vmem:[#allocation14 + $0x70] sm:$0xf]
    %v1796 = vld [vmem:[#allocation14 + $0x74] sm:$0xf]
    %v1797 = vld [vmem:[#allocation14 + $0x78] sm:$0xf]
    %v1798 = vld [vmem:[#allocation14 + $0x7c] sm:$0xf]
    %v1799 = vld [vmem:[#allocation16] sm:$0x1]
    %v1801 = vlaneseq
    %v1802 = vshrl.u32 %v1801, 7
    %v1803 = vsub.s32 0, %v1802
    %v1804 = vrot.slane %v1799, %v1803
    %v1838 = vunpack.c.l.b16 %v1767
    %v1839 = vunpack.c.l.b16 %v1768
    %v1840 = vunpack.c.l.b16 %v1769
    %v1841 = vunpack.c.l.b16 %v1770
    %v1842 = vunpack.c.l.b16 %v1771
    %v1843 = vunpack.c.l.b16 %v1772
    %v1844 = vunpack.c.l.b16 %v1773
    %v1845 = vunpack.c.l.b16 %v1774
    %v1846 = vunpack.c.l.b16 %v1775
    %v1847 = vunpack.c.l.b16 %v1776
    %v1848 = vunpack.c.l.b16 %v1777
    %v1849 = vunpack.c.l.b16 %v1778
    %v1850 = vunpack.c.l.b16 %v1779
    %v1851 = vunpack.c.l.b16 %v1780
    %v1852 = vunpack.c.l.b16 %v1781
    %v1853 = vunpack.c.l.b16 %v1782
    %v1854 = vunpack.c.l.b16 %v1783
    %v1855 = vunpack.c.l.b16 %v1784
    %v1856 = vunpack.c.l.b16 %v1785
    %v1857 = vunpack.c.l.b16 %v1786
    %v1858 = vunpack.c.l.b16 %v1787
    %v1859 = vunpack.c.l.b16 %v1788
    %v1860 = vunpack.c.l.b16 %v1789
    %v1861 = vunpack.c.l.b16 %v1790
    %v1862 = vunpack.c.l.b16 %v1791
    %v1863 = vunpack.c.l.b16 %v1792
    %v1864 = vunpack.c.l.b16 %v1793
    %v1865 = vunpack.c.l.b16 %v1794
    %v1866 = vunpack.c.l.b16 %v1795
    %v1867 = vunpack.c.l.b16 %v1796
    %v1868 = vunpack.c.l.b16 %v1797
    %v1869 = vunpack.c.l.b16 %v1798
    %v1870 = vpack.c.b16 %v1839, %v1838
    %v1871 = vpack.c.b16 %v1841, %v1840
    %v1872 = vpack.c.b16 %v1843, %v1842
    %v1873 = vpack.c.b16 %v1845, %v1844
    %v1874 = vpack.c.b16 %v1847, %v1846
    %v1875 = vpack.c.b16 %v1849, %v1848
    %v1876 = vpack.c.b16 %v1851, %v1850
    %v1877 = vpack.c.b16 %v1853, %v1852
    %v1878 = vpack.c.b16 %v1855, %v1854
    %v1879 = vpack.c.b16 %v1857, %v1856
    %v1880 = vpack.c.b16 %v1859, %v1858
    %v1881 = vpack.c.b16 %v1861, %v1860
    %v1882 = vpack.c.b16 %v1863, %v1862
    %v1883 = vpack.c.b16 %v1865, %v1864
    %v1884 = vpack.c.b16 %v1867, %v1866
    %v1885 = vpack.c.b16 %v1869, %v1868
    %1902 = vmatprep.subr.bf16.mxu0 0
    %1903 = vmatpush1.bf16.msra.mxu0 %v1870
    %1904 = vmatprep.subr.bf16.mxu0 0
    %1905 = vmatpush1.bf16.msra.mxu0 %v1871
    %1906 = vmatprep.subr.bf16.mxu0 0
    %1907 = vmatpush1.bf16.msra.mxu0 %v1872
    %1908 = vmatprep.subr.bf16.mxu0 0
    %1909 = vmatpush1.bf16.msra.mxu0 %v1873
    %1910 = vmatprep.subr.bf16.mxu0 0
    %1911 = vmatpush1.bf16.msra.mxu0 %v1874
    %1912 = vmatprep.subr.bf16.mxu0 0
    %1913 = vmatpush1.bf16.msra.mxu0 %v1875
    %1914 = vmatprep.subr.bf16.mxu0 0
    %1915 = vmatpush1.bf16.msra.mxu0 %v1876
    %1916 = vmatprep.subr.bf16.mxu0 0
    %1917 = vmatpush1.bf16.msra.mxu0 %v1877
    %1918 = vmatprep.subr.bf16.mxu0 0
    %1919 = vmatpush1.bf16.msra.mxu0 %v1878
    %1920 = vmatprep.subr.bf16.mxu0 0
    %1921 = vmatpush1.bf16.msra.mxu0 %v1879
    %1922 = vmatprep.subr.bf16.mxu0 0
    %1923 = vmatpush1.bf16.msra.mxu0 %v1880
    %1924 = vmatprep.subr.bf16.mxu0 0
    %1925 = vmatpush1.bf16.msra.mxu0 %v1881
    %1926 = vmatprep.subr.bf16.mxu0 0
    %1927 = vmatpush1.bf16.msra.mxu0 %v1882
    %1928 = vmatprep.subr.bf16.mxu0 0
    %1929 = vmatpush1.bf16.msra.mxu0 %v1883
    %1930 = vmatprep.subr.bf16.mxu0 0
    %1931 = vmatpush1.bf16.msra.mxu0 %v1884
    %1932 = vmatprep.subr.bf16.mxu0 0
    %1933 = vmatpush1.bf16.msra.mxu0 %v1885
    %1934 = vmatprep.mubr.bf16.mxu0 %v1766
    %1935 = vmatmul.mubr.bf16.gmra.mrb[0].mxu0 %v1765
    %v1936 = vpop.f32.mrb[0].mxu0
    %v1937 = vadd.f32 %v1804, %v1936
    %v1938 = vpop.f32.mrb[0].mxu0
    %v1939 = vpop.f32.mrb[0].mxu0
    %v1940 = vpop.f32.mrb[0].mxu0
    %1941 = vdwg.mxu0
    %v1942 = vmax.f32 %v1937, 0.0
    %v1943 = vpack.c.bf16 %v1942, %v1942
    %v1944 = vld [vmem:[#allocation17] sm:$0xf]
    %v1945 = vld [vmem:[#allocation17 + $0x4] sm:$0xf]
    %v1946 = vld [vmem:[#allocation17 + $0x8] sm:$0xf]
    %v1947 = vld [vmem:[#allocation17 + $0xc] sm:$0xf]
    %v1948 = vld [vmem:[#allocation17 + $0x10] sm:$0xf]
    %v1949 = vld [vmem:[#allocation17 + $0x14] sm:$0xf]
    %v1950 = vld [vmem:[#allocation17 + $0x18] sm:$0xf]
    %v1951 = vld [vmem:[#allocation17 + $0x1c] sm:$0xf]
    %v1952 = vld [vmem:[#allocation17 + $0x20] sm:$0xf]
    %v1953 = vld [vmem:[#allocation17 + $0x24] sm:$0xf]
    %v1954 = vld [vmem:[#allocation17 + $0x28] sm:$0xf]
    %v1955 = vld [vmem:[#allocation17 + $0x2c] sm:$0xf]
    %v1956 = vld [vmem:[#allocation17 + $0x30] sm:$0xf]
    %v1957 = vld [vmem:[#allocation17 + $0x34] sm:$0xf]
    %v1958 = vld [vmem:[#allocation17 + $0x38] sm:$0xf]
    %v1959 = vld [vmem:[#allocation17 + $0x3c] sm:$0xf]
    %v1960 = vld [vmem:[#allocation19] sm:$0x1]
    %v1962 = vlaneseq
    %v1963 = vshrl.u32 %v1962, 7
    %v1964 = vsub.s32 0, %v1963
    %v1965 = vrot.slane %v1960, %v1964
    %v1983 = vunpack.c.l.b16 %v1944
    %v1984 = vunpack.c.l.b16 %v1945
    %v1985 = vunpack.c.l.b16 %v1946
    %v1986 = vunpack.c.l.b16 %v1947
    %v1987 = vunpack.c.l.b16 %v1948
    %v1988 = vunpack.c.l.b16 %v1949
    %v1989 = vunpack.c.l.b16 %v1950
    %v1990 = vunpack.c.l.b16 %v1951
    %v1991 = vunpack.c.l.b16 %v1952
    %v1992 = vunpack.c.l.b16 %v1953
    %v1993 = vunpack.c.l.b16 %v1954
    %v1994 = vunpack.c.l.b16 %v1955
    %v1995 = vunpack.c.l.b16 %v1956
    %v1996 = vunpack.c.l.b16 %v1957
    %v1997 = vunpack.c.l.b16 %v1958
    %v1998 = vunpack.c.l.b16 %v1959
    %v1999 = vpack.c.b16 %v1984, %v1983
    %v2000 = vpack.c.b16 %v1986, %v1985
    %v2001 = vpack.c.b16 %v1988, %v1987
    %v2002 = vpack.c.b16 %v1990, %v1989
    %v2003 = vpack.c.b16 %v1992, %v1991
    %v2004 = vpack.c.b16 %v1994, %v1993
    %v2005 = vpack.c.b16 %v1996, %v1995
    %v2006 = vpack.c.b16 %v1998, %v1997
    %2015 = vmatprep.subr.bf16.mxu0 0
    %2016 = vmatpush1.bf16.msra.mxu0 %v1999
    %2017 = vmatprep.subr.bf16.mxu0 0
    %2018 = vmatpush1.bf16.msra.mxu0 %v2000
    %2019 = vmatprep.subr.bf16.mxu0 0
    %2020 = vmatpush1.bf16.msra.mxu0 %v2001
    %2021 = vmatprep.subr.bf16.mxu0 0
    %2022 = vmatpush1.bf16.msra.mxu0 %v2002
    %2023 = vmatprep.subr.bf16.mxu0 0
    %2024 = vmatpush1.bf16.msra.mxu0 %v2003
    %2025 = vmatprep.subr.bf16.mxu0 0
    %2026 = vmatpush1.bf16.msra.mxu0 %v2004
    %2027 = vmatprep.subr.bf16.mxu0 0
    %2028 = vmatpush1.bf16.msra.mxu0 %v2005
    %2029 = vmatprep.subr.bf16.mxu0 0
    %2030 = vmatpush1.bf16.msra.mxu0 %v2006
    %2031 = vmatprep.subr.bf16.mxu0 0
    %2032 = vmatpush1.bf16.msra.mxu0 0
    %2033 = vmatprep.subr.bf16.mxu0 0
    %2034 = vmatpush1.bf16.msra.mxu0 0
    %2035 = vmatprep.subr.bf16.mxu0 0
    %2036 = vmatpush1.bf16.msra.mxu0 0
    %2037 = vmatprep.subr.bf16.mxu0 0
    %2038 = vmatpush1.bf16.msra.mxu0 0
    %2039 = vmatprep.subr.bf16.mxu0 0
    %2040 = vmatpush1.bf16.msra.mxu0 0
    %2041 = vmatprep.subr.bf16.mxu0 0
    %2042 = vmatpush1.bf16.msra.mxu0 0
    %2043 = vmatprep.subr.bf16.mxu0 0
    %2044 = vmatpush1.bf16.msra.mxu0 0
    %2045 = vmatprep.subr.bf16.mxu0 0
    %2046 = vmatpush1.bf16.msra.mxu0 0
    %2047 = vmatprep.mubr.bf16.mxu0 0
    %2048 = vmatmul.mubr.bf16.gmra.mrb[0].mxu0 %v1943
    %v2049 = vpop.f32.mrb[0].mxu0
    %v2050 = vadd.f32 %v1965, %v2049
    %v2051 = vpop.f32.mrb[0].mxu0
    %v2052 = vpop.f32.mrb[0].mxu0
    %v2053 = vpop.f32.mrb[0].mxu0
    %2054 = vdwg.mxu0
    %v2055 = vlaneseq
    %v2056 = vand.u32 %v2055, 127
    %vm2057 = vcmp.lt.s32.totalorder %v2056, 10
    %v2058 = vsel %vm2057, %v2050, -1e+30
    %2059 = vmax.xlane.f32.xlu0 %v2058
    %v2060 = vpop.xlane.xlu0 %2059
    %v2061 = vsub.f32 %v2058, %v2060
    %v2062 = vmul.f32 %v2061, 1.442695
    %v2063 = vpow.pop %v2062
    %2064 = vadd.xlane.f32.xlu0 %v2063
    %v2065 = vpop.xlane.xlu0 %2064
    %v2066 = vlog2.pop %v2065
    %v2067 = vmul.f32 %v2066, 0.6931472
    %v2068 = vsub.f32 %v2061, %v2067
    %2069 = vst [vmem:[#allocation20] sm:$0xff] %v2068
    // Predicated region
    $region90: #{tpu_custom_call.1} parent=1 // pred_check
      _
    $region91: #{tpu_custom_call.1} parent=1 // pred_check_branch
      %2071 = sbr.rel (0) target = $region93
    $region92: #{tpu_custom_call.1} parent=1 // pred_region
      %s2073 = ssub.s32 128, 32
      %2074 = vsyncadd [#allocation4], %s2073
      %s2075 = sshll.u32 [#allocation20], 4
      %s2076 = int_to_ptr.vmem [resolvable:$true] %s2075
      %2081 = dma.vmem_to_hbm [thread:$0]  %s2076, 32, %s11, [#allocation4], 32, 32, 2
    $region93: #{tpu_custom_call.1} parent=1 // pred_fallthru
      _
    // Predicated region
    $region94: #{tpu_custom_call.1} parent=1 // pred_check
      _
    $region95: #{tpu_custom_call.1} parent=1 // pred_check_branch
      %2083 = sbr.rel (0) target = $region97
    $region96: #{tpu_custom_call.1} parent=1 // pred_region
      %2084 = dma.done [#allocation4], 128
    $region97: #{tpu_custom_call.1} parent=1 // pred_fallthru
      _
    %2085 = vsyncpa [#allocation3], 1
    %2086 = vsyncpa [#allocation6], 1
    %2087 = vsyncpa [#allocation9], 1
    %2088 = vsyncpa [#allocation12], 1
    %2089 = vsyncpa [#allocation15], 1
    %2090 = vsyncpa [#allocation18], 1
    %2091 = vsyncpa [#allocation4], 1

</llo_original>
